<compile_context>
chip_gen: v6e
topology: v6e:2x2x1
jax: 0.10.0
libtpu: 0.0.40
codegen_flags: <defaults>
</compile_context>

<pallas_src>
import functools

import jax
import jax.numpy as jnp
import numpy as np
from jax.experimental import pallas as pl
from jax.experimental.pallas import tpu as pltpu

_BAND = 128     # rows per lane-dense (1, 128) output row
_CHUNK = 1024   # rows per MXU matvec slab (= 8 bands)


def _cdiv(a, b):
    return -(-a // b)


def _round_up(x, m):
    return ((x + m - 1) // m) * m


def _vmem_capacity_bytes():
    try:
        return int(pltpu.get_tpu_info().vmem_capacity_bytes)
    except Exception:
        return 64 * 1024 * 1024          # conservative (v7x-sized) default


def _choose_tiling(m, h, itemsize):
    """(tile_rows, padded_rows, num_tiles, vmem_limit) for the flattened (m, h) reps."""
    big_vmem = _vmem_capacity_bytes() >= 100 * 1024 * 1024   # v5e/v6e: 128 MiB, v7x: 64 MiB
    target_bytes = (8 if big_vmem else 4) * 1024 * 1024      # reps-tile size target
    rows_cap = (target_bytes // max(1, h * itemsize)) // _CHUNK * _CHUNK
    rows_cap = max(_CHUNK, min(8 * _CHUNK, rows_cap))
    num_tiles = _cdiv(m, rows_cap)
    if (not big_vmem) and num_tiles > 1 and num_tiles % 2 == 1:
        num_tiles += 1                   # dual-TC chips: prefer an even "parallel" grid
    tm = _round_up(_cdiv(m, num_tiles), _CHUNK)
    num_tiles = _cdiv(m, tm)             # rebalance after rounding tm up
    m_pad = num_tiles * tm
    tile_bytes = tm * h * itemsize
    base = (64 if big_vmem else 32) * 1024 * 1024
    cap = (112 if big_vmem else 48) * 1024 * 1024
    vmem_limit = int(min(cap, max(base, 3 * tile_bytes + (4 << 20))))
    return tm, m_pad, num_tiles, vmem_limit


def _iter_dense_logits(reps_ref, w_ref, bias, tile_rows):
    """Yield (dense_row_index, logits (1, 128)) for every 128-row band of the tile.

    The H-reduction runs on the MXU over _CHUNK-row slabs; the (_CHUNK, 1) logit
    column is then scattered into lane-dense (1, 128) rows per band via a
    select-against-identity + sublane sum (safe Mosaic ops only).
    """
    w = w_ref[...]                                            # (H, 1) in reps dtype
    eye = (jax.lax.broadcasted_iota(jnp.int32, (_BAND, _BAND), 0)
           == jax.lax.broadcasted_iota(jnp.int32, (_BAND, _BAND), 1))
    for c in range(tile_rows // _CHUNK):
        col = jnp.dot(reps_ref[c * _CHUNK:(c + 1) * _CHUNK, :], w,
                      preferred_element_type=jnp.float32)     # (_CHUNK, 1) f32
        for s in range(_CHUNK // _BAND):
            cb = col[s * _BAND:(s + 1) * _BAND, :]            # (128, 1)
            # select (not multiply) so a junk/NaN boundary row stays confined to
            # its own lane instead of poisoning the whole band.
            row = jnp.sum(jnp.where(eye, cb, 0.0), axis=0, keepdims=True)  # (1, 128)
            yield c * (_CHUNK // _BAND) + s, row + bias


def _band_math(logits, m, lab, pos_limit):
    """Lane-dense per-band score + masked BCE (all (1, 128) f32)."""
    neg_limit = -pos_limit
    score = jnp.clip(logits, neg_limit, pos_limit)
    score = jnp.where(m > 0.0, score, neg_limit)
    bce = (jnp.maximum(logits, 0.0)
           - logits * lab
           + jnp.log1p(jnp.exp(-jnp.abs(logits))))
    bce = jnp.where(m > 0.0, bce, 0.0)
    return score, bce


def _kernel_fused(reps_ref, w_ref, b_ref, mask_ref, lab_ref,
                  score_ref, lsum_ref, *, pos_limit, tile_rows):
    """Per-tile lane-dense score + fused partial sum of the masked BCE loss."""
    total = jnp.zeros((1, 1), jnp.float32)
    for r, logits in _iter_dense_logits(reps_ref, w_ref, b_ref[0, 0], tile_rows):
        m = mask_ref[r:r + 1, :]
        lab = lab_ref[r:r + 1, :]
        score, bce = _band_math(logits, m, lab, pos_limit)
        score_ref[r:r + 1, :] = score
        total = total + jnp.sum(bce, axis=1, keepdims=True)
    lsum_ref[...] = total.reshape(1, 1, 1)


def _kernel_elementwise(reps_ref, w_ref, b_ref, mask_ref, lab_ref,
                        score_ref, lelem_ref, *, pos_limit, tile_rows):
    """Per-tile lane-dense score + per-row masked BCE (reduction='none')."""
    for r, logits in _iter_dense_logits(reps_ref, w_ref, b_ref[0, 0], tile_rows):
        m = mask_ref[r:r + 1, :]
        lab = lab_ref[r:r + 1, :]
        score, bce = _band_math(logits, m, lab, pos_limit)
        score_ref[r:r + 1, :] = score
        lelem_ref[r:r + 1, :] = bce


def filtering_layer_binary_single(reps, masks, binary_labels, weight, bias,
                                  num_limit=6.0, force_pos_cases=True,
                                  reduction='mean', loss_only=False):
    """reps: (B, N, H) f32/bf16; masks, binary_labels: (B, N) bool (labels may be None);
    weight: (1, H) or (H,); bias: scalar.  Returns (filter_score (B,N) f32 | None,
    filter_loss)."""
    # TODO(synk): nn.Dropout not applied (module constructed with dropout=None).
    B, N, H = reps.shape
    M = B * N
    pos_limit = float(num_limit)

    if loss_only and binary_labels is None:        # torch: (None, 0)
        return None, jnp.zeros((), jnp.float32)

    tm, m_pad, num_tiles, vmem_limit = _choose_tiling(M, H, reps.dtype.itemsize)

    reps_flat = reps.reshape(M, H)                 # free metadata reshape
    if M < tm:                                     # tiny input: cheap zero pad
        reps_flat = jnp.pad(reps_flat, ((0, tm - M), (0, 0)))
    # For M >= tm, reps stays unpadded; only the last block is a boundary block
    # whose trailing junk rows are excluded by the zero-padded mask below.

    mask_flat = masks.reshape(M).astype(jnp.float32)
    if binary_labels is None:
        lab_flat = jnp.zeros((M,), jnp.float32)
    else:
        lab_flat = binary_labels.reshape(M).astype(jnp.float32)
    pad = m_pad - M
    if pad:
        mask_flat = jnp.pad(mask_flat, (0, pad))   # padded/junk rows: mask = 0
        lab_flat = jnp.pad(lab_flat, (0, pad))
    mask_d = mask_flat.reshape(m_pad // _BAND, _BAND)   # lane-dense (rows//128, 128)
    lab_d = lab_flat.reshape(m_pad // _BAND, _BAND)

    w_col = jnp.asarray(weight, jnp.float32).reshape(H, 1).astype(reps.dtype)
    b = jnp.asarray(bias, jnp.float32).reshape(1, 1)

    in_specs = [
        pl.BlockSpec((tm, H), lambda i: (i, 0)),               # reps row tile
        pl.BlockSpec((H, 1), lambda i: (0, 0)),                # weight column (resident)
        pl.BlockSpec(memory_space=pltpu.MemorySpace.SMEM),     # bias scalar
        pl.BlockSpec((tm // _BAND, _BAND), lambda i: (i, 0)),  # mask (lane dense)
        pl.BlockSpec((tm // _BAND, _BAND), lambda i: (i, 0)),  # labels (lane dense)
    ]
    dense_out_spec = pl.BlockSpec((tm // _BAND, _BAND), lambda i: (i, 0))
    dense_shape = jax.ShapeDtypeStruct((m_pad // _BAND, _BAND), jnp.float32)
    compiler_params = pltpu.CompilerParams(
        dimension_semantics=("parallel",),         # rows independent -> megacore friendly
        vmem_limit_bytes=vmem_limit,
    )

    if reduction == 'none' and binary_labels is not None:
        kern = functools.partial(_kernel_elementwise, pos_limit=pos_limit, tile_rows=tm)
        score_d, bce_d = pl.pallas_call(
            kern,
            grid=(num_tiles,),
            out_shape=(dense_shape, dense_shape),
            in_specs=in_specs,
            out_specs=(dense_out_spec, dense_out_spec),
            compiler_params=compiler_params,
        )(reps_flat, w_col, b, mask_d, lab_d)
        loss = bce_d.reshape(-1)[:M].reshape(B, N)
    else:
        kern = functools.partial(_kernel_fused, pos_limit=pos_limit, tile_rows=tm)
        score_d, lsum = pl.pallas_call(
            kern,
            grid=(num_tiles,),
            out_shape=(dense_shape,
                       jax.ShapeDtypeStruct((num_tiles, 1, 1), jnp.float32)),
            in_specs=in_specs,
            out_specs=(dense_out_spec,
                       pl.BlockSpec((1, 1, 1), lambda i: (i, 0, 0))),
            compiler_params=compiler_params,
        )(reps_flat, w_col, b, mask_d, lab_d)
        if binary_labels is None:
            loss = jnp.zeros((), jnp.float32)      # torch returns 0
        elif reduction == 'sum':
            loss = jnp.sum(lsum)
        else:                                      # 'mean' / 'ave'
            denom = jnp.maximum(jnp.sum(masks.astype(jnp.float32)), 1.0)
            loss = jnp.sum(lsum) / denom

    if loss_only:
        return None, loss

    score = score_d.reshape(-1)[:M].reshape(B, N)
    if (binary_labels is not None) and force_pos_cases:
        # Teacher forcing on the tiny (B, N) output — never re-reads reps.
        score = jnp.where(binary_labels, pos_limit, score)
    return score, loss


# ----------------------------------------------------------------------------
# Reference (plain JAX) and self-test
# ----------------------------------------------------------------------------
def _reference(reps, masks, binary_labels, weight, bias, num_limit):
    w = jnp.asarray(weight, jnp.float32).reshape(-1)
    logits = jnp.sum(reps.astype(jnp.float32) * w[None, None, :], axis=-1) \
        + jnp.float32(bias)
    score = jnp.clip(logits, -num_limit, num_limit)
    score = jnp.where(masks, score, -num_limit)
    score = jnp.where(binary_labels, num_limit, score)
    lab = binary_labels.astype(jnp.float32)
    m = masks.astype(jnp.float32)
    bce = (jnp.maximum(logits, 0.0) - logits * lab
           + jnp.log1p(jnp.exp(-jnp.abs(logits)))) * m
    loss_sum = jnp.sum(bce)
    loss_mean = loss_sum / jnp.maximum(jnp.sum(m), 1.0)
    return score, bce, loss_mean, loss_sum


def _make_inputs(key, B, N, H, dtype=jnp.float32):
    k_reps, k_w, k_mask, k_lab = jax.random.split(key, 4)
    reps = jax.random.normal(k_reps, (B, N, H), dtype=jnp.float32).astype(dtype)
    bound = float(np.sqrt(6.0 / (H + 1)))          # xavier_uniform_ for a (1, H) weight
    weight = jax.random.uniform(k_w, (1, H), dtype=jnp.float32,
                                minval=-bound, maxval=bound)
    bias = jnp.float32(0.05)
    masks = jax.random.uniform(k_mask, (B, N)) > 0.25
    labels = (jax.random.uniform(k_lab, (B, N)) > 0.75) & masks
    return reps, masks, labels, weight, bias


if __name__ == "__main__":
    key = jax.random.PRNGKey(0)
    TOL = dict(rtol=1e-4, atol=1e-4)

    # ---- small shape (single tile, single chunk) ----
    k0, k1, k2, k3 = jax.random.split(key, 4)
    reps, masks, labels, weight, bias = _make_inputs(k0, 2, 8, 32)
    score, loss = filtering_layer_binary_single(
        reps, masks, labels, weight, bias, num_limit=6.0, reduction='mean')
    jax.block_until_ready((score, loss))
    ref_s, ref_b, ref_lm, ref_ls = _reference(reps, masks, labels, weight, bias, 6.0)
    np.testing.assert_allclose(np.asarray(score), np.asarray(ref_s), **TOL)
    np.testing.assert_allclose(np.asarray(loss), np.asarray(ref_lm), **TOL)

    # reduction='none' and loss_only paths on the same inputs
    score_n, loss_e = filtering_layer_binary_single(
        reps, masks, labels, weight, bias, num_limit=6.0, reduction='none')
    jax.block_until_ready((score_n, loss_e))
    np.testing.assert_allclose(np.asarray(score_n), np.asarray(ref_s), **TOL)
    np.testing.assert_allclose(np.asarray(loss_e), np.asarray(ref_b), **TOL)
    none_score, loss_lo = filtering_layer_binary_single(
        reps, masks, labels, weight, bias, num_limit=6.0, loss_only=True)
    jax.block_until_ready(loss_lo)
    assert none_score is None
    np.testing.assert_allclose(np.asarray(loss_lo), np.asarray(ref_lm), **TOL)

    # ---- medium shape: multi-chunk single tile + row padding, 'mean' and 'sum' ----
    reps2, masks2, labels2, weight2, bias2 = _make_inputs(k1, 4, 300, 256)
    score2, loss2 = filtering_layer_binary_single(
        reps2, masks2, labels2, weight2, bias2, num_limit=6.0, reduction='mean')
    _, loss2s = filtering_layer_binary_single(
        reps2, masks2, labels2, weight2, bias2, num_limit=6.0, reduction='sum')
    jax.block_until_ready((score2, loss2, loss2s))
    ref_s2, _, ref_lm2, ref_ls2 = _reference(reps2, masks2, labels2, weight2, bias2, 6.0)
    np.testing.assert_allclose(np.asarray(score2), np.asarray(ref_s2), **TOL)
    np.testing.assert_allclose(np.asarray(loss2), np.asarray(ref_lm2), **TOL)
    np.testing.assert_allclose(np.asarray(loss2s), np.asarray(ref_ls2), rtol=1e-4, atol=1e-3)

    # ---- larger shape: multi-tile grid with a boundary (un-padded reps) block ----
    reps3, masks3, labels3, weight3, bias3 = _make_inputs(k2, 2, 5000, 128)
    score3, loss3 = filtering_layer_binary_single(
        reps3, masks3, labels3, weight3, bias3, num_limit=6.0, reduction='mean')
    jax.block_until_ready((score3, loss3))
    ref_s3, _, ref_lm3, _ = _reference(reps3, masks3, labels3, weight3, bias3, 6.0)
    np.testing.assert_allclose(np.asarray(score3), np.asarray(ref_s3), **TOL)
    np.testing.assert_allclose(np.asarray(loss3), np.asarray(ref_lm3), **TOL)

    # ---- bf16 reps path (native MXU, no whole-tile upcast); loose tolerance ----
    reps4, masks4, labels4, weight4, bias4 = _make_inputs(k3, 4, 300, 256, jnp.bfloat16)
    score4, loss4 = filtering_layer_binary_single(
        reps4, masks4, labels4, weight4, bias4, num_limit=6.0, reduction='mean')
    jax.block_until_ready((score4, loss4))
    ref_s4, _, ref_lm4, _ = _reference(reps4.astype(jnp.float32), masks4, labels4,
                                       weight4, bias4, 6.0)
    np.testing.assert_allclose(np.asarray(score4), np.asarray(ref_s4), rtol=0.1, atol=0.25)
    np.testing.assert_allclose(np.asarray(loss4), np.asarray(ref_lm4), rtol=0.1, atol=0.1)

    print("KERNEL_OK")
</pallas_src>

<mosaic_0001>
module attributes {stable_mosaic.version = 11 : i64} {
  func.func @_kernel_fused(%arg0: i32, %arg1: memref<1024x32xf32, #tpu.memory_space<vmem>>, %arg2: memref<32x1xf32, #tpu.memory_space<vmem>>, %arg3: memref<1x1xf32, #tpu.memory_space<smem>>, %arg4: memref<8x128xf32, #tpu.memory_space<vmem>>, %arg5: memref<8x128xf32, #tpu.memory_space<vmem>>, %arg6: memref<8x128xf32, #tpu.memory_space<vmem>>, %arg7: memref<1x1x1xf32, #tpu.memory_space<vmem>>) attributes {dimension_semantics = [#tpu.dimension_semantics<parallel>], iteration_bounds = array<i64: 1>, scalar_prefetch = 0 : i64, scratch_operands = 0 : i64, tpu.core_type = #tpu.core_type<tc>, window_params = [{transform_indices = @transform_0, window_bounds = array<i64: 1024, 32>}, {pipeline_mode = #tpu.pipeline_mode<synchronous>, transform_indices = @transform_1, window_bounds = array<i64: 32, 1>}, {transform_indices = @transform_2, window_bounds = array<i64: 1, 1>}, {transform_indices = @transform_3, window_bounds = array<i64: 8, 128>}, {transform_indices = @transform_4, window_bounds = array<i64: 8, 128>}, {transform_indices = @transform_5, window_bounds = array<i64: 8, 128>}, {transform_indices = @transform_6, window_bounds = array<i64: 1, 1, 1>}]} {
    %cst = arith.constant 0.000000e+00 : f32
    %0 = vector.broadcast %cst : f32 to vector<1x1xf32>
    %c0 = arith.constant 0 : index
    %c0_0 = arith.constant 0 : index
    %1 = memref.load %arg3[%c0, %c0_0] : memref<1x1xf32, #tpu.memory_space<smem>>
    %c0_1 = arith.constant 0 : index
    %c0_2 = arith.constant 0 : index
    %2 = vector.load %arg2[%c0_1, %c0_2] : memref<32x1xf32, #tpu.memory_space<vmem>>, vector<32x1xf32>
    %3 = tpu.iota {dimensions = array<i32: 0>} : vector<128x128xi32>
    %4 = tpu.iota {dimensions = array<i32: 1>} : vector<128x128xi32>
    %5 = arith.cmpi eq, %3, %4 : vector<128x128xi32>
    %c0_3 = arith.constant 0 : index
    %c0_4 = arith.constant 0 : index
    %6 = vector.load %arg1[%c0_3, %c0_4] : memref<1024x32xf32, #tpu.memory_space<vmem>>, vector<1024x32xf32>
    %cst_5 = arith.constant dense<0.000000e+00> : vector<1024x1xf32>
    %7 = tpu.matmul %6, %2, %cst_5 {dimension_numbers = #tpu.dot_dimension_numbers<[1], [0], [0], [1], [0, 0, 1, 1], [], []>} : vector<1024x32xf32>, vector<32x1xf32>, vector<1024x1xf32> -> vector<1024x1xf32>
    %8 = vector.extract_strided_slice %7 {offsets = [0, 0], sizes = [128, 1], strides = [1, 1]} : vector<1024x1xf32> to vector<128x1xf32>
    %cst_6 = arith.constant 0.000000e+00 : f32
    %9 = vector.shape_cast %8 : vector<128x1xf32> to vector<128x1xf32>
    %10 = vector.broadcast %9 : vector<128x1xf32> to vector<128x128xf32>
    %11 = vector.broadcast %cst_6 : f32 to vector<128x128xf32>
    %12 = arith.select %5, %10, %11 : vector<128x128xi1>, vector<128x128xf32>
    %cst_7 = arith.constant dense<0.000000e+00> : vector<128xf32>
    %13 = vector.multi_reduction <add>, %12, %cst_7 [0] : vector<128x128xf32> to vector<128xf32>
    %14 = vector.shape_cast %13 : vector<128xf32> to vector<1x128xf32>
    %15 = vector.broadcast %1 : f32 to vector<1x128xf32>
    %16 = arith.addf %14, %15 : vector<1x128xf32>
    %c0_8 = arith.constant 0 : index
    %c0_9 = arith.constant 0 : index
    %17 = vector.load %arg4[%c0_8, %c0_9] : memref<8x128xf32, #tpu.memory_space<vmem>>, vector<1x128xf32>
    %c0_10 = arith.constant 0 : index
    %c0_11 = arith.constant 0 : index
    %18 = vector.load %arg5[%c0_10, %c0_11] : memref<8x128xf32, #tpu.memory_space<vmem>>, vector<1x128xf32>
    %cst_12 = arith.constant -6.000000e+00 : f32
    %cst_13 = arith.constant 6.000000e+00 : f32
    %19 = vector.broadcast %cst_12 : f32 to vector<1x128xf32>
    %20 = arith.maximumf %19, %16 : vector<1x128xf32>
    %21 = vector.broadcast %cst_13 : f32 to vector<1x128xf32>
    %22 = arith.minimumf %21, %20 : vector<1x128xf32>
    %cst_14 = arith.constant 0.000000e+00 : f32
    %23 = vector.broadcast %cst_14 : f32 to vector<1x128xf32>
    %24 = arith.cmpf ogt, %17, %23 : vector<1x128xf32>
    %cst_15 = arith.constant -6.000000e+00 : f32
    %25 = vector.broadcast %cst_15 : f32 to vector<1x128xf32>
    %26 = arith.select %24, %22, %25 : vector<1x128xi1>, vector<1x128xf32>
    %cst_16 = arith.constant 0.000000e+00 : f32
    %27 = vector.broadcast %cst_16 : f32 to vector<1x128xf32>
    %28 = arith.maximumf %16, %27 : vector<1x128xf32>
    %29 = arith.mulf %16, %18 : vector<1x128xf32>
    %30 = arith.subf %28, %29 : vector<1x128xf32>
    %31 = math.absf %16 : vector<1x128xf32>
    %cst_17 = arith.constant 0.000000e+00 : f32
    %32 = vector.broadcast %cst_17 : f32 to vector<1x128xf32>
    %33 = arith.subf %32, %31 : vector<1x128xf32>
    %34 = math.exp %33 : vector<1x128xf32>
    %35 = math.log1p %34 : vector<1x128xf32>
    %36 = arith.addf %30, %35 : vector<1x128xf32>
    %cst_18 = arith.constant 0.000000e+00 : f32
    %37 = vector.broadcast %cst_18 : f32 to vector<1x128xf32>
    %38 = arith.cmpf ogt, %17, %37 : vector<1x128xf32>
    %cst_19 = arith.constant 0.000000e+00 : f32
    %39 = vector.broadcast %cst_19 : f32 to vector<1x128xf32>
    %40 = arith.select %38, %36, %39 : vector<1x128xi1>, vector<1x128xf32>
    %c0_20 = arith.constant 0 : index
    %c0_21 = arith.constant 0 : index
    %41 = vector.load %arg6[%c0_20, %c0_21] : memref<8x128xf32, #tpu.memory_space<vmem>>, vector<1x128xf32>
    tpu.vector_store %arg6[%c0_20, %c0_21], %26 {strides = array<i32>} : memref<8x128xf32, #tpu.memory_space<vmem>>, vector<1x128xf32>,
    %cst_22 = arith.constant dense<0.000000e+00> : vector<1xf32>
    %42 = vector.multi_reduction <add>, %40, %cst_22 [1] : vector<1x128xf32> to vector<1xf32>
    %43 = vector.shape_cast %42 : vector<1xf32> to vector<1x1xf32>
    %44 = arith.addf %0, %43 : vector<1x1xf32>
    %45 = vector.extract_strided_slice %7 {offsets = [128, 0], sizes = [128, 1], strides = [1, 1]} : vector<1024x1xf32> to vector<128x1xf32>
    %cst_23 = arith.constant 0.000000e+00 : f32
    %46 = vector.shape_cast %45 : vector<128x1xf32> to vector<128x1xf32>
    %47 = vector.broadcast %46 : vector<128x1xf32> to vector<128x128xf32>
    %48 = vector.broadcast %cst_23 : f32 to vector<128x128xf32>
    %49 = arith.select %5, %47, %48 : vector<128x128xi1>, vector<128x128xf32>
    %cst_24 = arith.constant dense<0.000000e+00> : vector<128xf32>
    %50 = vector.multi_reduction <add>, %49, %cst_24 [0] : vector<128x128xf32> to vector<128xf32>
    %51 = vector.shape_cast %50 : vector<128xf32> to vector<1x128xf32>
    %52 = vector.broadcast %1 : f32 to vector<1x128xf32>
    %53 = arith.addf %51, %52 : vector<1x128xf32>
    %c1 = arith.constant 1 : index
    %c0_25 = arith.constant 0 : index
    %54 = vector.load %arg4[%c1, %c0_25] : memref<8x128xf32, #tpu.memory_space<vmem>>, vector<1x128xf32>
    %c1_26 = arith.constant 1 : index
    %c0_27 = arith.constant 0 : index
    %55 = vector.load %arg5[%c1_26, %c0_27] : memref<8x128xf32, #tpu.memory_space<vmem>>, vector<1x128xf32>
    %cst_28 = arith.constant -6.000000e+00 : f32
    %cst_29 = arith.constant 6.000000e+00 : f32
    %56 = vector.broadcast %cst_28 : f32 to vector<1x128xf32>
    %57 = arith.maximumf %56, %53 : vector<1x128xf32>
    %58 = vector.broadcast %cst_29 : f32 to vector<1x128xf32>
    %59 = arith.minimumf %58, %57 : vector<1x128xf32>
    %cst_30 = arith.constant 0.000000e+00 : f32
    %60 = vector.broadcast %cst_30 : f32 to vector<1x128xf32>
    %61 = arith.cmpf ogt, %54, %60 : vector<1x128xf32>
    %cst_31 = arith.constant -6.000000e+00 : f32
    %62 = vector.broadcast %cst_31 : f32 to vector<1x128xf32>
    %63 = arith.select %61, %59, %62 : vector<1x128xi1>, vector<1x128xf32>
    %cst_32 = arith.constant 0.000000e+00 : f32
    %64 = vector.broadcast %cst_32 : f32 to vector<1x128xf32>
    %65 = arith.maximumf %53, %64 : vector<1x128xf32>
    %66 = arith.mulf %53, %55 : vector<1x128xf32>
    %67 = arith.subf %65, %66 : vector<1x128xf32>
    %68 = math.absf %53 : vector<1x128xf32>
    %cst_33 = arith.constant 0.000000e+00 : f32
    %69 = vector.broadcast %cst_33 : f32 to vector<1x128xf32>
    %70 = arith.subf %69, %68 : vector<1x128xf32>
    %71 = math.exp %70 : vector<1x128xf32>
    %72 = math.log1p %71 : vector<1x128xf32>
    %73 = arith.addf %67, %72 : vector<1x128xf32>
    %cst_34 = arith.constant 0.000000e+00 : f32
    %74 = vector.broadcast %cst_34 : f32 to vector<1x128xf32>
    %75 = arith.cmpf ogt, %54, %74 : vector<1x128xf32>
    %cst_35 = arith.constant 0.000000e+00 : f32
    %76 = vector.broadcast %cst_35 : f32 to vector<1x128xf32>
    %77 = arith.select %75, %73, %76 : vector<1x128xi1>, vector<1x128xf32>
    %c1_36 = arith.constant 1 : index
    %c0_37 = arith.constant 0 : index
    %78 = vector.load %arg6[%c1_36, %c0_37] : memref<8x128xf32, #tpu.memory_space<vmem>>, vector<1x128xf32>
    tpu.vector_store %arg6[%c1_36, %c0_37], %63 {strides = array<i32>} : memref<8x128xf32, #tpu.memory_space<vmem>>, vector<1x128xf32>,
    %cst_38 = arith.constant dense<0.000000e+00> : vector<1xf32>
    %79 = vector.multi_reduction <add>, %77, %cst_38 [1] : vector<1x128xf32> to vector<1xf32>
    %80 = vector.shape_cast %79 : vector<1xf32> to vector<1x1xf32>
    %81 = arith.addf %44, %80 : vector<1x1xf32>
    %82 = vector.extract_strided_slice %7 {offsets = [256, 0], sizes = [128, 1], strides = [1, 1]} : vector<1024x1xf32> to vector<128x1xf32>
    %cst_39 = arith.constant 0.000000e+00 : f32
    %83 = vector.shape_cast %82 : vector<128x1xf32> to vector<128x1xf32>
    %84 = vector.broadcast %83 : vector<128x1xf32> to vector<128x128xf32>
    %85 = vector.broadcast %cst_39 : f32 to vector<128x128xf32>
    %86 = arith.select %5, %84, %85 : vector<128x128xi1>, vector<128x128xf32>
    %cst_40 = arith.constant dense<0.000000e+00> : vector<128xf32>
    %87 = vector.multi_reduction <add>, %86, %cst_40 [0] : vector<128x128xf32> to vector<128xf32>
    %88 = vector.shape_cast %87 : vector<128xf32> to vector<1x128xf32>
    %89 = vector.broadcast %1 : f32 to vector<1x128xf32>
    %90 = arith.addf %88, %89 : vector<1x128xf32>
    %c2 = arith.constant 2 : index
    %c0_41 = arith.constant 0 : index
    %91 = vector.load %arg4[%c2, %c0_41] : memref<8x128xf32, #tpu.memory_space<vmem>>, vector<1x128xf32>
    %c2_42 = arith.constant 2 : index
    %c0_43 = arith.constant 0 : index
    %92 = vector.load %arg5[%c2_42, %c0_43] : memref<8x128xf32, #tpu.memory_space<vmem>>, vector<1x128xf32>
    %cst_44 = arith.constant -6.000000e+00 : f32
    %cst_45 = arith.constant 6.000000e+00 : f32
    %93 = vector.broadcast %cst_44 : f32 to vector<1x128xf32>
    %94 = arith.maximumf %93, %90 : vector<1x128xf32>
    %95 = vector.broadcast %cst_45 : f32 to vector<1x128xf32>
    %96 = arith.minimumf %95, %94 : vector<1x128xf32>
    %cst_46 = arith.constant 0.000000e+00 : f32
    %97 = vector.broadcast %cst_46 : f32 to vector<1x128xf32>
    %98 = arith.cmpf ogt, %91, %97 : vector<1x128xf32>
    %cst_47 = arith.constant -6.000000e+00 : f32
    %99 = vector.broadcast %cst_47 : f32 to vector<1x128xf32>
    %100 = arith.select %98, %96, %99 : vector<1x128xi1>, vector<1x128xf32>
    %cst_48 = arith.constant 0.000000e+00 : f32
    %101 = vector.broadcast %cst_48 : f32 to vector<1x128xf32>
    %102 = arith.maximumf %90, %101 : vector<1x128xf32>
    %103 = arith.mulf %90, %92 : vector<1x128xf32>
    %104 = arith.subf %102, %103 : vector<1x128xf32>
    %105 = math.absf %90 : vector<1x128xf32>
    %cst_49 = arith.constant 0.000000e+00 : f32
    %106 = vector.broadcast %cst_49 : f32 to vector<1x128xf32>
    %107 = arith.subf %106, %105 : vector<1x128xf32>
    %108 = math.exp %107 : vector<1x128xf32>
    %109 = math.log1p %108 : vector<1x128xf32>
    %110 = arith.addf %104, %109 : vector<1x128xf32>
    %cst_50 = arith.constant 0.000000e+00 : f32
    %111 = vector.broadcast %cst_50 : f32 to vector<1x128xf32>
    %112 = arith.cmpf ogt, %91, %111 : vector<1x128xf32>
    %cst_51 = arith.constant 0.000000e+00 : f32
    %113 = vector.broadcast %cst_51 : f32 to vector<1x128xf32>
    %114 = arith.select %112, %110, %113 : vector<1x128xi1>, vector<1x128xf32>
    %c2_52 = arith.constant 2 : index
    %c0_53 = arith.constant 0 : index
    %115 = vector.load %arg6[%c2_52, %c0_53] : memref<8x128xf32, #tpu.memory_space<vmem>>, vector<1x128xf32>
    tpu.vector_store %arg6[%c2_52, %c0_53], %100 {strides = array<i32>} : memref<8x128xf32, #tpu.memory_space<vmem>>, vector<1x128xf32>,
    %cst_54 = arith.constant dense<0.000000e+00> : vector<1xf32>
    %116 = vector.multi_reduction <add>, %114, %cst_54 [1] : vector<1x128xf32> to vector<1xf32>
    %117 = vector.shape_cast %116 : vector<1xf32> to vector<1x1xf32>
    %118 = arith.addf %81, %117 : vector<1x1xf32>
    %119 = vector.extract_strided_slice %7 {offsets = [384, 0], sizes = [128, 1], strides = [1, 1]} : vector<1024x1xf32> to vector<128x1xf32>
    %cst_55 = arith.constant 0.000000e+00 : f32
    %120 = vector.shape_cast %119 : vector<128x1xf32> to vector<128x1xf32>
    %121 = vector.broadcast %120 : vector<128x1xf32> to vector<128x128xf32>
    %122 = vector.broadcast %cst_55 : f32 to vector<128x128xf32>
    %123 = arith.select %5, %121, %122 : vector<128x128xi1>, vector<128x128xf32>
    %cst_56 = arith.constant dense<0.000000e+00> : vector<128xf32>
    %124 = vector.multi_reduction <add>, %123, %cst_56 [0] : vector<128x128xf32> to vector<128xf32>
    %125 = vector.shape_cast %124 : vector<128xf32> to vector<1x128xf32>
    %126 = vector.broadcast %1 : f32 to vector<1x128xf32>
    %127 = arith.addf %125, %126 : vector<1x128xf32>
    %c3 = arith.constant 3 : index
    %c0_57 = arith.constant 0 : index
    %128 = vector.load %arg4[%c3, %c0_57] : memref<8x128xf32, #tpu.memory_space<vmem>>, vector<1x128xf32>
    %c3_58 = arith.constant 3 : index
    %c0_59 = arith.constant 0 : index
    %129 = vector.load %arg5[%c3_58, %c0_59] : memref<8x128xf32, #tpu.memory_space<vmem>>, vector<1x128xf32>
    %cst_60 = arith.constant -6.000000e+00 : f32
    %cst_61 = arith.constant 6.000000e+00 : f32
    %130 = vector.broadcast %cst_60 : f32 to vector<1x128xf32>
    %131 = arith.maximumf %130, %127 : vector<1x128xf32>
    %132 = vector.broadcast %cst_61 : f32 to vector<1x128xf32>
    %133 = arith.minimumf %132, %131 : vector<1x128xf32>
    %cst_62 = arith.constant 0.000000e+00 : f32
    %134 = vector.broadcast %cst_62 : f32 to vector<1x128xf32>
    %135 = arith.cmpf ogt, %128, %134 : vector<1x128xf32>
    %cst_63 = arith.constant -6.000000e+00 : f32
    %136 = vector.broadcast %cst_63 : f32 to vector<1x128xf32>
    %137 = arith.select %135, %133, %136 : vector<1x128xi1>, vector<1x128xf32>
    %cst_64 = arith.constant 0.000000e+00 : f32
    %138 = vector.broadcast %cst_64 : f32 to vector<1x128xf32>
    %139 = arith.maximumf %127, %138 : vector<1x128xf32>
    %140 = arith.mulf %127, %129 : vector<1x128xf32>
    %141 = arith.subf %139, %140 : vector<1x128xf32>
    %142 = math.absf %127 : vector<1x128xf32>
    %cst_65 = arith.constant 0.000000e+00 : f32
    %143 = vector.broadcast %cst_65 : f32 to vector<1x128xf32>
    %144 = arith.subf %143, %142 : vector<1x128xf32>
    %145 = math.exp %144 : vector<1x128xf32>
    %146 = math.log1p %145 : vector<1x128xf32>
    %147 = arith.addf %141, %146 : vector<1x128xf32>
    %cst_66 = arith.constant 0.000000e+00 : f32
    %148 = vector.broadcast %cst_66 : f32 to vector<1x128xf32>
    %149 = arith.cmpf ogt, %128, %148 : vector<1x128xf32>
    %cst_67 = arith.constant 0.000000e+00 : f32
    %150 = vector.broadcast %cst_67 : f32 to vector<1x128xf32>
    %151 = arith.select %149, %147, %150 : vector<1x128xi1>, vector<1x128xf32>
    %c3_68 = arith.constant 3 : index
    %c0_69 = arith.constant 0 : index
    %152 = vector.load %arg6[%c3_68, %c0_69] : memref<8x128xf32, #tpu.memory_space<vmem>>, vector<1x128xf32>
    tpu.vector_store %arg6[%c3_68, %c0_69], %137 {strides = array<i32>} : memref<8x128xf32, #tpu.memory_space<vmem>>, vector<1x128xf32>,
    %cst_70 = arith.constant dense<0.000000e+00> : vector<1xf32>
    %153 = vector.multi_reduction <add>, %151, %cst_70 [1] : vector<1x128xf32> to vector<1xf32>
    %154 = vector.shape_cast %153 : vector<1xf32> to vector<1x1xf32>
    %155 = arith.addf %118, %154 : vector<1x1xf32>
    %156 = vector.extract_strided_slice %7 {offsets = [512, 0], sizes = [128, 1], strides = [1, 1]} : vector<1024x1xf32> to vector<128x1xf32>
    %cst_71 = arith.constant 0.000000e+00 : f32
    %157 = vector.shape_cast %156 : vector<128x1xf32> to vector<128x1xf32>
    %158 = vector.broadcast %157 : vector<128x1xf32> to vector<128x128xf32>
    %159 = vector.broadcast %cst_71 : f32 to vector<128x128xf32>
    %160 = arith.select %5, %158, %159 : vector<128x128xi1>, vector<128x128xf32>
    %cst_72 = arith.constant dense<0.000000e+00> : vector<128xf32>
    %161 = vector.multi_reduction <add>, %160, %cst_72 [0] : vector<128x128xf32> to vector<128xf32>
    %162 = vector.shape_cast %161 : vector<128xf32> to vector<1x128xf32>
    %163 = vector.broadcast %1 : f32 to vector<1x128xf32>
    %164 = arith.addf %162, %163 : vector<1x128xf32>
    %c4 = arith.constant 4 : index
    %c0_73 = arith.constant 0 : index
    %165 = vector.load %arg4[%c4, %c0_73] : memref<8x128xf32, #tpu.memory_space<vmem>>, vector<1x128xf32>
    %c4_74 = arith.constant 4 : index
    %c0_75 = arith.constant 0 : index
    %166 = vector.load %arg5[%c4_74, %c0_75] : memref<8x128xf32, #tpu.memory_space<vmem>>, vector<1x128xf32>
    %cst_76 = arith.constant -6.000000e+00 : f32
    %cst_77 = arith.constant 6.000000e+00 : f32
    %167 = vector.broadcast %cst_76 : f32 to vector<1x128xf32>
    %168 = arith.maximumf %167, %164 : vector<1x128xf32>
    %169 = vector.broadcast %cst_77 : f32 to vector<1x128xf32>
    %170 = arith.minimumf %169, %168 : vector<1x128xf32>
    %cst_78 = arith.constant 0.000000e+00 : f32
    %171 = vector.broadcast %cst_78 : f32 to vector<1x128xf32>
    %172 = arith.cmpf ogt, %165, %171 : vector<1x128xf32>
    %cst_79 = arith.constant -6.000000e+00 : f32
    %173 = vector.broadcast %cst_79 : f32 to vector<1x128xf32>
    %174 = arith.select %172, %170, %173 : vector<1x128xi1>, vector<1x128xf32>
    %cst_80 = arith.constant 0.000000e+00 : f32
    %175 = vector.broadcast %cst_80 : f32 to vector<1x128xf32>
    %176 = arith.maximumf %164, %175 : vector<1x128xf32>
    %177 = arith.mulf %164, %166 : vector<1x128xf32>
    %178 = arith.subf %176, %177 : vector<1x128xf32>
    %179 = math.absf %164 : vector<1x128xf32>
    %cst_81 = arith.constant 0.000000e+00 : f32
    %180 = vector.broadcast %cst_81 : f32 to vector<1x128xf32>
    %181 = arith.subf %180, %179 : vector<1x128xf32>
    %182 = math.exp %181 : vector<1x128xf32>
    %183 = math.log1p %182 : vector<1x128xf32>
    %184 = arith.addf %178, %183 : vector<1x128xf32>
    %cst_82 = arith.constant 0.000000e+00 : f32
    %185 = vector.broadcast %cst_82 : f32 to vector<1x128xf32>
    %186 = arith.cmpf ogt, %165, %185 : vector<1x128xf32>
    %cst_83 = arith.constant 0.000000e+00 : f32
    %187 = vector.broadcast %cst_83 : f32 to vector<1x128xf32>
    %188 = arith.select %186, %184, %187 : vector<1x128xi1>, vector<1x128xf32>
    %c4_84 = arith.constant 4 : index
    %c0_85 = arith.constant 0 : index
    %189 = vector.load %arg6[%c4_84, %c0_85] : memref<8x128xf32, #tpu.memory_space<vmem>>, vector<1x128xf32>
    tpu.vector_store %arg6[%c4_84, %c0_85], %174 {strides = array<i32>} : memref<8x128xf32, #tpu.memory_space<vmem>>, vector<1x128xf32>,
    %cst_86 = arith.constant dense<0.000000e+00> : vector<1xf32>
    %190 = vector.multi_reduction <add>, %188, %cst_86 [1] : vector<1x128xf32> to vector<1xf32>
    %191 = vector.shape_cast %190 : vector<1xf32> to vector<1x1xf32>
    %192 = arith.addf %155, %191 : vector<1x1xf32>
    %193 = vector.extract_strided_slice %7 {offsets = [640, 0], sizes = [128, 1], strides = [1, 1]} : vector<1024x1xf32> to vector<128x1xf32>
    %cst_87 = arith.constant 0.000000e+00 : f32
    %194 = vector.shape_cast %193 : vector<128x1xf32> to vector<128x1xf32>
    %195 = vector.broadcast %194 : vector<128x1xf32> to vector<128x128xf32>
    %196 = vector.broadcast %cst_87 : f32 to vector<128x128xf32>
    %197 = arith.select %5, %195, %196 : vector<128x128xi1>, vector<128x128xf32>
    %cst_88 = arith.constant dense<0.000000e+00> : vector<128xf32>
    %198 = vector.multi_reduction <add>, %197, %cst_88 [0] : vector<128x128xf32> to vector<128xf32>
    %199 = vector.shape_cast %198 : vector<128xf32> to vector<1x128xf32>
    %200 = vector.broadcast %1 : f32 to vector<1x128xf32>
    %201 = arith.addf %199, %200 : vector<1x128xf32>
    %c5 = arith.constant 5 : index
    %c0_89 = arith.constant 0 : index
    %202 = vector.load %arg4[%c5, %c0_89] : memref<8x128xf32, #tpu.memory_space<vmem>>, vector<1x128xf32>
    %c5_90 = arith.constant 5 : index
    %c0_91 = arith.constant 0 : index
    %203 = vector.load %arg5[%c5_90, %c0_91] : memref<8x128xf32, #tpu.memory_space<vmem>>, vector<1x128xf32>
    %cst_92 = arith.constant -6.000000e+00 : f32
    %cst_93 = arith.constant 6.000000e+00 : f32
    %204 = vector.broadcast %cst_92 : f32 to vector<1x128xf32>
    %205 = arith.maximumf %204, %201 : vector<1x128xf32>
    %206 = vector.broadcast %cst_93 : f32 to vector<1x128xf32>
    %207 = arith.minimumf %206, %205 : vector<1x128xf32>
    %cst_94 = arith.constant 0.000000e+00 : f32
    %208 = vector.broadcast %cst_94 : f32 to vector<1x128xf32>
    %209 = arith.cmpf ogt, %202, %208 : vector<1x128xf32>
    %cst_95 = arith.constant -6.000000e+00 : f32
    %210 = vector.broadcast %cst_95 : f32 to vector<1x128xf32>
    %211 = arith.select %209, %207, %210 : vector<1x128xi1>, vector<1x128xf32>
    %cst_96 = arith.constant 0.000000e+00 : f32
    %212 = vector.broadcast %cst_96 : f32 to vector<1x128xf32>
    %213 = arith.maximumf %201, %212 : vector<1x128xf32>
    %214 = arith.mulf %201, %203 : vector<1x128xf32>
    %215 = arith.subf %213, %214 : vector<1x128xf32>
    %216 = math.absf %201 : vector<1x128xf32>
    %cst_97 = arith.constant 0.000000e+00 : f32
    %217 = vector.broadcast %cst_97 : f32 to vector<1x128xf32>
    %218 = arith.subf %217, %216 : vector<1x128xf32>
    %219 = math.exp %218 : vector<1x128xf32>
    %220 = math.log1p %219 : vector<1x128xf32>
    %221 = arith.addf %215, %220 : vector<1x128xf32>
    %cst_98 = arith.constant 0.000000e+00 : f32
    %222 = vector.broadcast %cst_98 : f32 to vector<1x128xf32>
    %223 = arith.cmpf ogt, %202, %222 : vector<1x128xf32>
    %cst_99 = arith.constant 0.000000e+00 : f32
    %224 = vector.broadcast %cst_99 : f32 to vector<1x128xf32>
    %225 = arith.select %223, %221, %224 : vector<1x128xi1>, vector<1x128xf32>
    %c5_100 = arith.constant 5 : index
    %c0_101 = arith.constant 0 : index
    %226 = vector.load %arg6[%c5_100, %c0_101] : memref<8x128xf32, #tpu.memory_space<vmem>>, vector<1x128xf32>
    tpu.vector_store %arg6[%c5_100, %c0_101], %211 {strides = array<i32>} : memref<8x128xf32, #tpu.memory_space<vmem>>, vector<1x128xf32>,
    %cst_102 = arith.constant dense<0.000000e+00> : vector<1xf32>
    %227 = vector.multi_reduction <add>, %225, %cst_102 [1] : vector<1x128xf32> to vector<1xf32>
    %228 = vector.shape_cast %227 : vector<1xf32> to vector<1x1xf32>
    %229 = arith.addf %192, %228 : vector<1x1xf32>
    %230 = vector.extract_strided_slice %7 {offsets = [768, 0], sizes = [128, 1], strides = [1, 1]} : vector<1024x1xf32> to vector<128x1xf32>
    %cst_103 = arith.constant 0.000000e+00 : f32
    %231 = vector.shape_cast %230 : vector<128x1xf32> to vector<128x1xf32>
    %232 = vector.broadcast %231 : vector<128x1xf32> to vector<128x128xf32>
    %233 = vector.broadcast %cst_103 : f32 to vector<128x128xf32>
    %234 = arith.select %5, %232, %233 : vector<128x128xi1>, vector<128x128xf32>
    %cst_104 = arith.constant dense<0.000000e+00> : vector<128xf32>
    %235 = vector.multi_reduction <add>, %234, %cst_104 [0] : vector<128x128xf32> to vector<128xf32>
    %236 = vector.shape_cast %235 : vector<128xf32> to vector<1x128xf32>
    %237 = vector.broadcast %1 : f32 to vector<1x128xf32>
    %238 = arith.addf %236, %237 : vector<1x128xf32>
    %c6 = arith.constant 6 : index
    %c0_105 = arith.constant 0 : index
    %239 = vector.load %arg4[%c6, %c0_105] : memref<8x128xf32, #tpu.memory_space<vmem>>, vector<1x128xf32>
    %c6_106 = arith.constant 6 : index
    %c0_107 = arith.constant 0 : index
    %240 = vector.load %arg5[%c6_106, %c0_107] : memref<8x128xf32, #tpu.memory_space<vmem>>, vector<1x128xf32>
    %cst_108 = arith.constant -6.000000e+00 : f32
    %cst_109 = arith.constant 6.000000e+00 : f32
    %241 = vector.broadcast %cst_108 : f32 to vector<1x128xf32>
    %242 = arith.maximumf %241, %238 : vector<1x128xf32>
    %243 = vector.broadcast %cst_109 : f32 to vector<1x128xf32>
    %244 = arith.minimumf %243, %242 : vector<1x128xf32>
    %cst_110 = arith.constant 0.000000e+00 : f32
    %245 = vector.broadcast %cst_110 : f32 to vector<1x128xf32>
    %246 = arith.cmpf ogt, %239, %245 : vector<1x128xf32>
    %cst_111 = arith.constant -6.000000e+00 : f32
    %247 = vector.broadcast %cst_111 : f32 to vector<1x128xf32>
    %248 = arith.select %246, %244, %247 : vector<1x128xi1>, vector<1x128xf32>
    %cst_112 = arith.constant 0.000000e+00 : f32
    %249 = vector.broadcast %cst_112 : f32 to vector<1x128xf32>
    %250 = arith.maximumf %238, %249 : vector<1x128xf32>
    %251 = arith.mulf %238, %240 : vector<1x128xf32>
    %252 = arith.subf %250, %251 : vector<1x128xf32>
    %253 = math.absf %238 : vector<1x128xf32>
    %cst_113 = arith.constant 0.000000e+00 : f32
    %254 = vector.broadcast %cst_113 : f32 to vector<1x128xf32>
    %255 = arith.subf %254, %253 : vector<1x128xf32>
    %256 = math.exp %255 : vector<1x128xf32>
    %257 = math.log1p %256 : vector<1x128xf32>
    %258 = arith.addf %252, %257 : vector<1x128xf32>
    %cst_114 = arith.constant 0.000000e+00 : f32
    %259 = vector.broadcast %cst_114 : f32 to vector<1x128xf32>
    %260 = arith.cmpf ogt, %239, %259 : vector<1x128xf32>
    %cst_115 = arith.constant 0.000000e+00 : f32
    %261 = vector.broadcast %cst_115 : f32 to vector<1x128xf32>
    %262 = arith.select %260, %258, %261 : vector<1x128xi1>, vector<1x128xf32>
    %c6_116 = arith.constant 6 : index
    %c0_117 = arith.constant 0 : index
    %263 = vector.load %arg6[%c6_116, %c0_117] : memref<8x128xf32, #tpu.memory_space<vmem>>, vector<1x128xf32>
    tpu.vector_store %arg6[%c6_116, %c0_117], %248 {strides = array<i32>} : memref<8x128xf32, #tpu.memory_space<vmem>>, vector<1x128xf32>,
    %cst_118 = arith.constant dense<0.000000e+00> : vector<1xf32>
    %264 = vector.multi_reduction <add>, %262, %cst_118 [1] : vector<1x128xf32> to vector<1xf32>
    %265 = vector.shape_cast %264 : vector<1xf32> to vector<1x1xf32>
    %266 = arith.addf %229, %265 : vector<1x1xf32>
    %267 = vector.extract_strided_slice %7 {offsets = [896, 0], sizes = [128, 1], strides = [1, 1]} : vector<1024x1xf32> to vector<128x1xf32>
    %cst_119 = arith.constant 0.000000e+00 : f32
    %268 = vector.shape_cast %267 : vector<128x1xf32> to vector<128x1xf32>
    %269 = vector.broadcast %268 : vector<128x1xf32> to vector<128x128xf32>
    %270 = vector.broadcast %cst_119 : f32 to vector<128x128xf32>
    %271 = arith.select %5, %269, %270 : vector<128x128xi1>, vector<128x128xf32>
    %cst_120 = arith.constant dense<0.000000e+00> : vector<128xf32>
    %272 = vector.multi_reduction <add>, %271, %cst_120 [0] : vector<128x128xf32> to vector<128xf32>
    %273 = vector.shape_cast %272 : vector<128xf32> to vector<1x128xf32>
    %274 = vector.broadcast %1 : f32 to vector<1x128xf32>
    %275 = arith.addf %273, %274 : vector<1x128xf32>
    %c7 = arith.constant 7 : index
    %c0_121 = arith.constant 0 : index
    %276 = vector.load %arg4[%c7, %c0_121] : memref<8x128xf32, #tpu.memory_space<vmem>>, vector<1x128xf32>
    %c7_122 = arith.constant 7 : index
    %c0_123 = arith.constant 0 : index
    %277 = vector.load %arg5[%c7_122, %c0_123] : memref<8x128xf32, #tpu.memory_space<vmem>>, vector<1x128xf32>
    %cst_124 = arith.constant -6.000000e+00 : f32
    %cst_125 = arith.constant 6.000000e+00 : f32
    %278 = vector.broadcast %cst_124 : f32 to vector<1x128xf32>
    %279 = arith.maximumf %278, %275 : vector<1x128xf32>
    %280 = vector.broadcast %cst_125 : f32 to vector<1x128xf32>
    %281 = arith.minimumf %280, %279 : vector<1x128xf32>
    %cst_126 = arith.constant 0.000000e+00 : f32
    %282 = vector.broadcast %cst_126 : f32 to vector<1x128xf32>
    %283 = arith.cmpf ogt, %276, %282 : vector<1x128xf32>
    %cst_127 = arith.constant -6.000000e+00 : f32
    %284 = vector.broadcast %cst_127 : f32 to vector<1x128xf32>
    %285 = arith.select %283, %281, %284 : vector<1x128xi1>, vector<1x128xf32>
    %cst_128 = arith.constant 0.000000e+00 : f32
    %286 = vector.broadcast %cst_128 : f32 to vector<1x128xf32>
    %287 = arith.maximumf %275, %286 : vector<1x128xf32>
    %288 = arith.mulf %275, %277 : vector<1x128xf32>
    %289 = arith.subf %287, %288 : vector<1x128xf32>
    %290 = math.absf %275 : vector<1x128xf32>
    %cst_129 = arith.constant 0.000000e+00 : f32
    %291 = vector.broadcast %cst_129 : f32 to vector<1x128xf32>
    %292 = arith.subf %291, %290 : vector<1x128xf32>
    %293 = math.exp %292 : vector<1x128xf32>
    %294 = math.log1p %293 : vector<1x128xf32>
    %295 = arith.addf %289, %294 : vector<1x128xf32>
    %cst_130 = arith.constant 0.000000e+00 : f32
    %296 = vector.broadcast %cst_130 : f32 to vector<1x128xf32>
    %297 = arith.cmpf ogt, %276, %296 : vector<1x128xf32>
    %cst_131 = arith.constant 0.000000e+00 : f32
    %298 = vector.broadcast %cst_131 : f32 to vector<1x128xf32>
    %299 = arith.select %297, %295, %298 : vector<1x128xi1>, vector<1x128xf32>
    %c7_132 = arith.constant 7 : index
    %c0_133 = arith.constant 0 : index
    %300 = vector.load %arg6[%c7_132, %c0_133] : memref<8x128xf32, #tpu.memory_space<vmem>>, vector<1x128xf32>
    tpu.vector_store %arg6[%c7_132, %c0_133], %285 {strides = array<i32>} : memref<8x128xf32, #tpu.memory_space<vmem>>, vector<1x128xf32>,
    %cst_134 = arith.constant dense<0.000000e+00> : vector<1xf32>
    %301 = vector.multi_reduction <add>, %299, %cst_134 [1] : vector<1x128xf32> to vector<1xf32>
    %302 = vector.shape_cast %301 : vector<1xf32> to vector<1x1xf32>
    %303 = arith.addf %266, %302 : vector<1x1xf32>
    %304 = vector.shape_cast %303 : vector<1x1xf32> to vector<1x1x1xf32>
    %c0_135 = arith.constant 0 : index
    %c0_136 = arith.constant 0 : index
    %c0_137 = arith.constant 0 : index
    %305 = vector.load %arg7[%c0_135, %c0_136, %c0_137] : memref<1x1x1xf32, #tpu.memory_space<vmem>>, vector<1x1x1xf32>
    tpu.vector_store %arg7[%c0_135, %c0_136, %c0_137], %304 {strides = array<i32>} : memref<1x1x1xf32, #tpu.memory_space<vmem>>, vector<1x1x1xf32>,
    return
  }
  func.func @transform_0(%arg0: i32) -> (i32, i32) {
    %c0_i32 = arith.constant 0 : i32
    %c0_i32_0 = arith.constant 0 : i32
    return %arg0, %c0_i32 : i32, i32
  }
  func.func @transform_1(%arg0: i32) -> (i32, i32) {
    %c0_i32 = arith.constant 0 : i32
    %c0_i32_0 = arith.constant 0 : i32
    %c0_i32_1 = arith.constant 0 : i32
    return %c0_i32, %c0_i32_0 : i32, i32
  }
  func.func @transform_2(%arg0: i32) -> (i32, i32) {
    %c0_i32 = arith.constant 0 : i32
    %c0_i32_0 = arith.constant 0 : i32
    %c0_i32_1 = arith.constant 0 : i32
    return %c0_i32, %c0_i32_0 : i32, i32
  }
  func.func @transform_3(%arg0: i32) -> (i32, i32) {
    %c0_i32 = arith.constant 0 : i32
    %c0_i32_0 = arith.constant 0 : i32
    return %arg0, %c0_i32 : i32, i32
  }
  func.func @transform_4(%arg0: i32) -> (i32, i32) {
    %c0_i32 = arith.constant 0 : i32
    %c0_i32_0 = arith.constant 0 : i32
    return %arg0, %c0_i32 : i32, i32
  }
  func.func @transform_5(%arg0: i32) -> (i32, i32) {
    %c0_i32 = arith.constant 0 : i32
    %c0_i32_0 = arith.constant 0 : i32
    return %arg0, %c0_i32 : i32, i32
  }
  func.func @transform_6(%arg0: i32) -> (i32, i32, i32) {
    %c0_i32 = arith.constant 0 : i32
    %c0_i32_0 = arith.constant 0 : i32
    %c0_i32_1 = arith.constant 0 : i32
    return %arg0, %c0_i32, %c0_i32_0 : i32, i32, i32
  }
}

</mosaic_0001>

<llo_original>
// kernel: tpu_custom_call.1
$region0: #{tpu_custom_call.1}
  #allocation0 [shape = 'u32[]', space=smem, size = 0x4, offset = 0x4, fixed_abs, tag = 'smem constant byte address 0x4 - core index']
  #allocation1 [shape = 'u32[144,128]{1,0:T(1,128)}', space=vmem, size = 0x12000, scoped, tag = 'internal scratch']
  #allocation2 [shape = 'f32[1,1]{1,0:T(1,128)S(6)}', space=smem, size = 0x200, scoped, tag = 'scoped memory for tpu_custom_call.1']
  %s0 = inlined_call_operand.vmem [shape: f32[1024,32], index: 0, kind: input, shape index: {}]
  %s1 = inlined_call_operand.vmem [shape: f32[32,1], index: 1, kind: input, shape index: {}]
  %s2 = inlined_call_operand.<no memory space> [shape: f32[1,1], index: 2, kind: input, shape index: {}]
  %s3 = inlined_call_operand.vmem [shape: f32[8,128], index: 3, kind: input, shape index: {}]
  %s4 = inlined_call_operand.vmem [shape: f32[8,128], index: 4, kind: input, shape index: {}]
  %s5 = inlined_call_operand.hbm [shape: f32[8,128], index: 5, kind: output, shape index: {0}]
  %s6 = inlined_call_operand.hbm [shape: f32[1,1,1], index: 6, kind: output, shape index: {1}]
  %7 = xla_tuple %s5, %s6
  %s8 = sld [smem:[#allocation0]]
  $region38: #{tpu_custom_call.1} parent=0
    _
  %s10 = ssub.s32 1, %s8
  %s11 = scalar_select 0, %s10, %s8
  %12 = sst [smem:[#allocation2]] %s2
  $region1: #{tpu_custom_call.1} parent=0
    #allocation3 [shape = 'u8[4096]{0}', space=vmem, size = 0x1000, scoped, tag = 'output window, operand 0, single buffered']
    #allocation4 [shape = 's32[1]{0}', space=sflag, size = 0x4, scoped, tag = 'scoped memory for tpu_custom_call.1']
    #allocation5 [shape = 'u8[512]{0}', space=vmem, size = 0x400, scoped, tag = 'output window, operand 1, single buffered']
    #allocation6 [shape = 's32[1]{0}', space=sflag, size = 0x4, scoped, tag = 'scoped memory for tpu_custom_call.1']
    %13 = vsyncpa [#allocation4], 0
    %14 = vsyncpa [#allocation6], 0
    // Predicated region
    $region2: #{tpu_custom_call.1} parent=1 // pred_check
      _
    $region3: #{tpu_custom_call.1} parent=1 // pred_check_branch
      %16 = sbr.rel (0) target = $region5
    $region4: #{tpu_custom_call.1} parent=1 // pred_region
      _
    $region5: #{tpu_custom_call.1} parent=1 // pred_fallthru
      _
    // Predicated region
    $region6: #{tpu_custom_call.1} parent=1 // pred_check
      _
    $region7: #{tpu_custom_call.1} parent=1 // pred_check_branch
      %18 = sbr.rel (0) target = $region9
    $region8: #{tpu_custom_call.1} parent=1 // pred_region
      _
    $region9: #{tpu_custom_call.1} parent=1 // pred_fallthru
      _
    // Predicated region
    $region10: #{tpu_custom_call.1} parent=1 // pred_check
      _
    $region11: #{tpu_custom_call.1} parent=1 // pred_check_branch
      %20 = sbr.rel (0) target = $region13
    $region12: #{tpu_custom_call.1} parent=1 // pred_region
      _
    $region13: #{tpu_custom_call.1} parent=1 // pred_fallthru
      _
    // Predicated region
    $region14: #{tpu_custom_call.1} parent=1 // pred_check
      _
    $region15: #{tpu_custom_call.1} parent=1 // pred_check_branch
      %22 = sbr.rel (0) target = $region17
    $region16: #{tpu_custom_call.1} parent=1 // pred_region
      _
    $region17: #{tpu_custom_call.1} parent=1 // pred_fallthru
      _
    // Predicated region
    $region18: #{tpu_custom_call.1} parent=1 // pred_check
      _
    $region19: #{tpu_custom_call.1} parent=1 // pred_check_branch
      %24 = sbr.rel (0) target = $region21
    $region20: #{tpu_custom_call.1} parent=1 // pred_region
      _
    $region21: #{tpu_custom_call.1} parent=1 // pred_fallthru
      _
    %s25 = sld [smem:[#allocation2]]
    %v26 = vld [vmem:[%s1] sm:$0xff]
    %v27 = vld [vmem:[%s1 + $0x8] sm:$0xff]
    %v28 = vld [vmem:[%s1 + $0x10] sm:$0xff]
    %v29 = vld [vmem:[%s1 + $0x18] sm:$0xff]
    %v30 = vlaneseq
    %v31 = vshrl.u32 %v30, 7
    %v32 = vadd.s32 %v31, 8
    %v33 = vadd.s32 %v31, 16
    %v34 = vadd.s32 %v31, 24
    %v35 = vadd.s32 %v31, 32
    %v36 = vadd.s32 %v31, 40
    %v37 = vadd.s32 %v31, 48
    %v38 = vadd.s32 %v31, 56
    %v39 = vadd.s32 %v31, 64
    %v40 = vadd.s32 %v31, 72
    %v41 = vadd.s32 %v31, 80
    %v42 = vadd.s32 %v31, 88
    %v43 = vadd.s32 %v31, 96
    %v44 = vadd.s32 %v31, 104
    %v45 = vadd.s32 %v31, 112
    %v46 = vadd.s32 %v31, 120
    %v47 = vlaneseq
    %v48 = vand.u32 %v47, 127
    %vm49 = vcmp.eq.s32.totalorder %v31, %v48
    %vm50 = vcmp.eq.s32.totalorder %v32, %v48
    %vm51 = vcmp.eq.s32.totalorder %v33, %v48
    %vm52 = vcmp.eq.s32.totalorder %v34, %v48
    %vm53 = vcmp.eq.s32.totalorder %v35, %v48
    %vm54 = vcmp.eq.s32.totalorder %v36, %v48
    %vm55 = vcmp.eq.s32.totalorder %v37, %v48
    %vm56 = vcmp.eq.s32.totalorder %v38, %v48
    %vm57 = vcmp.eq.s32.totalorder %v39, %v48
    %vm58 = vcmp.eq.s32.totalorder %v40, %v48
    %vm59 = vcmp.eq.s32.totalorder %v41, %v48
    %vm60 = vcmp.eq.s32.totalorder %v42, %v48
    %vm61 = vcmp.eq.s32.totalorder %v43, %v48
    %vm62 = vcmp.eq.s32.totalorder %v44, %v48
    %vm63 = vcmp.eq.s32.totalorder %v45, %v48
    %vm64 = vcmp.eq.s32.totalorder %v46, %v48
    %v65 = vld [vmem:[%s0] sm:$0xff]
    %v66 = vld [vmem:[%s0 + $0x8] sm:$0xff]
    %v67 = vld [vmem:[%s0 + $0x10] sm:$0xff]
    %v68 = vld [vmem:[%s0 + $0x18] sm:$0xff]
    %v69 = vld [vmem:[%s0 + $0x20] sm:$0xff]
    %v70 = vld [vmem:[%s0 + $0x28] sm:$0xff]
    %v71 = vld [vmem:[%s0 + $0x30] sm:$0xff]
    %v72 = vld [vmem:[%s0 + $0x38] sm:$0xff]
    %v73 = vld [vmem:[%s0 + $0x40] sm:$0xff]
    %v74 = vld [vmem:[%s0 + $0x48] sm:$0xff]
    %v75 = vld [vmem:[%s0 + $0x50] sm:$0xff]
    %v76 = vld [vmem:[%s0 + $0x58] sm:$0xff]
    %v77 = vld [vmem:[%s0 + $0x60] sm:$0xff]
    %v78 = vld [vmem:[%s0 + $0x68] sm:$0xff]
    %v79 = vld [vmem:[%s0 + $0x70] sm:$0xff]
    %v80 = vld [vmem:[%s0 + $0x78] sm:$0xff]
    %v81 = vld [vmem:[%s0 + $0x80] sm:$0xff]
    %v82 = vld [vmem:[%s0 + $0x88] sm:$0xff]
    %v83 = vld [vmem:[%s0 + $0x90] sm:$0xff]
    %v84 = vld [vmem:[%s0 + $0x98] sm:$0xff]
    %v85 = vld [vmem:[%s0 + $0xa0] sm:$0xff]
    %v86 = vld [vmem:[%s0 + $0xa8] sm:$0xff]
    %v87 = vld [vmem:[%s0 + $0xb0] sm:$0xff]
    %v88 = vld [vmem:[%s0 + $0xb8] sm:$0xff]
    %v89 = vld [vmem:[%s0 + $0xc0] sm:$0xff]
    %v90 = vld [vmem:[%s0 + $0xc8] sm:$0xff]
    %v91 = vld [vmem:[%s0 + $0xd0] sm:$0xff]
    %v92 = vld [vmem:[%s0 + $0xd8] sm:$0xff]
    %v93 = vld [vmem:[%s0 + $0xe0] sm:$0xff]
    %v94 = vld [vmem:[%s0 + $0xe8] sm:$0xff]
    %v95 = vld [vmem:[%s0 + $0xf0] sm:$0xff]
    %v96 = vld [vmem:[%s0 + $0xf8] sm:$0xff]
    %v97 = vld [vmem:[%s0 + $0x100] sm:$0xff]
    %v98 = vld [vmem:[%s0 + $0x108] sm:$0xff]
    %v99 = vld [vmem:[%s0 + $0x110] sm:$0xff]
    %v100 = vld [vmem:[%s0 + $0x118] sm:$0xff]
    %v101 = vld [vmem:[%s0 + $0x120] sm:$0xff]
    %v102 = vld [vmem:[%s0 + $0x128] sm:$0xff]
    %v103 = vld [vmem:[%s0 + $0x130] sm:$0xff]
    %v104 = vld [vmem:[%s0 + $0x138] sm:$0xff]
    %v105 = vld [vmem:[%s0 + $0x140] sm:$0xff]
    %v106 = vld [vmem:[%s0 + $0x148] sm:$0xff]
    %v107 = vld [vmem:[%s0 + $0x150] sm:$0xff]
    %v108 = vld [vmem:[%s0 + $0x158] sm:$0xff]
    %v109 = vld [vmem:[%s0 + $0x160] sm:$0xff]
    %v110 = vld [vmem:[%s0 + $0x168] sm:$0xff]
    %v111 = vld [vmem:[%s0 + $0x170] sm:$0xff]
    %v112 = vld [vmem:[%s0 + $0x178] sm:$0xff]
    %v113 = vld [vmem:[%s0 + $0x180] sm:$0xff]
    %v114 = vld [vmem:[%s0 + $0x188] sm:$0xff]
    %v115 = vld [vmem:[%s0 + $0x190] sm:$0xff]
    %v116 = vld [vmem:[%s0 + $0x198] sm:$0xff]
    %v117 = vld [vmem:[%s0 + $0x1a0] sm:$0xff]
    %v118 = vld [vmem:[%s0 + $0x1a8] sm:$0xff]
    %v119 = vld [vmem:[%s0 + $0x1b0] sm:$0xff]
    %v120 = vld [vmem:[%s0 + $0x1b8] sm:$0xff]
    %v121 = vld [vmem:[%s0 + $0x1c0] sm:$0xff]
    %v122 = vld [vmem:[%s0 + $0x1c8] sm:$0xff]
    %v123 = vld [vmem:[%s0 + $0x1d0] sm:$0xff]
    %v124 = vld [vmem:[%s0 + $0x1d8] sm:$0xff]
    %v125 = vld [vmem:[%s0 + $0x1e0] sm:$0xff]
    %v126 = vld [vmem:[%s0 + $0x1e8] sm:$0xff]
    %v127 = vld [vmem:[%s0 + $0x1f0] sm:$0xff]
    %v128 = vld [vmem:[%s0 + $0x1f8] sm:$0xff]
    %v129 = vld [vmem:[%s0 + $0x200] sm:$0xff]
    %v130 = vld [vmem:[%s0 + $0x208] sm:$0xff]
    %v131 = vld [vmem:[%s0 + $0x210] sm:$0xff]
    %v132 = vld [vmem:[%s0 + $0x218] sm:$0xff]
    %v133 = vld [vmem:[%s0 + $0x220] sm:$0xff]
    %v134 = vld [vmem:[%s0 + $0x228] sm:$0xff]
    %v135 = vld [vmem:[%s0 + $0x230] sm:$0xff]
    %v136 = vld [vmem:[%s0 + $0x238] sm:$0xff]
    %v137 = vld [vmem:[%s0 + $0x240] sm:$0xff]
    %v138 = vld [vmem:[%s0 + $0x248] sm:$0xff]
    %v139 = vld [vmem:[%s0 + $0x250] sm:$0xff]
    %v140 = vld [vmem:[%s0 + $0x258] sm:$0xff]
    %v141 = vld [vmem:[%s0 + $0x260] sm:$0xff]
    %v142 = vld [vmem:[%s0 + $0x268] sm:$0xff]
    %v143 = vld [vmem:[%s0 + $0x270] sm:$0xff]
    %v144 = vld [vmem:[%s0 + $0x278] sm:$0xff]
    %v145 = vld [vmem:[%s0 + $0x280] sm:$0xff]
    %v146 = vld [vmem:[%s0 + $0x288] sm:$0xff]
    %v147 = vld [vmem:[%s0 + $0x290] sm:$0xff]
    %v148 = vld [vmem:[%s0 + $0x298] sm:$0xff]
    %v149 = vld [vmem:[%s0 + $0x2a0] sm:$0xff]
    %v150 = vld [vmem:[%s0 + $0x2a8] sm:$0xff]
    %v151 = vld [vmem:[%s0 + $0x2b0] sm:$0xff]
    %v152 = vld [vmem:[%s0 + $0x2b8] sm:$0xff]
    %v153 = vld [vmem:[%s0 + $0x2c0] sm:$0xff]
    %v154 = vld [vmem:[%s0 + $0x2c8] sm:$0xff]
    %v155 = vld [vmem:[%s0 + $0x2d0] sm:$0xff]
    %v156 = vld [vmem:[%s0 + $0x2d8] sm:$0xff]
    %v157 = vld [vmem:[%s0 + $0x2e0] sm:$0xff]
    %v158 = vld [vmem:[%s0 + $0x2e8] sm:$0xff]
    %v159 = vld [vmem:[%s0 + $0x2f0] sm:$0xff]
    %v160 = vld [vmem:[%s0 + $0x2f8] sm:$0xff]
    %v161 = vld [vmem:[%s0 + $0x300] sm:$0xff]
    %v162 = vld [vmem:[%s0 + $0x308] sm:$0xff]
    %v163 = vld [vmem:[%s0 + $0x310] sm:$0xff]
    %v164 = vld [vmem:[%s0 + $0x318] sm:$0xff]
    %v165 = vld [vmem:[%s0 + $0x320] sm:$0xff]
    %v166 = vld [vmem:[%s0 + $0x328] sm:$0xff]
    %v167 = vld [vmem:[%s0 + $0x330] sm:$0xff]
    %v168 = vld [vmem:[%s0 + $0x338] sm:$0xff]
    %v169 = vld [vmem:[%s0 + $0x340] sm:$0xff]
    %v170 = vld [vmem:[%s0 + $0x348] sm:$0xff]
    %v171 = vld [vmem:[%s0 + $0x350] sm:$0xff]
    %v172 = vld [vmem:[%s0 + $0x358] sm:$0xff]
    %v173 = vld [vmem:[%s0 + $0x360] sm:$0xff]
    %v174 = vld [vmem:[%s0 + $0x368] sm:$0xff]
    %v175 = vld [vmem:[%s0 + $0x370] sm:$0xff]
    %v176 = vld [vmem:[%s0 + $0x378] sm:$0xff]
    %v177 = vld [vmem:[%s0 + $0x380] sm:$0xff]
    %v178 = vld [vmem:[%s0 + $0x388] sm:$0xff]
    %v179 = vld [vmem:[%s0 + $0x390] sm:$0xff]
    %v180 = vld [vmem:[%s0 + $0x398] sm:$0xff]
    %v181 = vld [vmem:[%s0 + $0x3a0] sm:$0xff]
    %v182 = vld [vmem:[%s0 + $0x3a8] sm:$0xff]
    %v183 = vld [vmem:[%s0 + $0x3b0] sm:$0xff]
    %v184 = vld [vmem:[%s0 + $0x3b8] sm:$0xff]
    %v185 = vld [vmem:[%s0 + $0x3c0] sm:$0xff]
    %v186 = vld [vmem:[%s0 + $0x3c8] sm:$0xff]
    %v187 = vld [vmem:[%s0 + $0x3d0] sm:$0xff]
    %v188 = vld [vmem:[%s0 + $0x3d8] sm:$0xff]
    %v189 = vld [vmem:[%s0 + $0x3e0] sm:$0xff]
    %v190 = vld [vmem:[%s0 + $0x3e8] sm:$0xff]
    %v191 = vld [vmem:[%s0 + $0x3f0] sm:$0xff]
    %v192 = vld [vmem:[%s0 + $0x3f8] sm:$0xff]
    %vm193 = vcmask 261120
    %v195 = vsel %vm193, %v65, 0
    %v198 = vsel %vm193, %v66, 0
    %v201 = vsel %vm193, %v67, 0
    %v204 = vsel %vm193, %v68, 0
    %v207 = vsel %vm193, %v69, 0
    %v210 = vsel %vm193, %v70, 0
    %v213 = vsel %vm193, %v71, 0
    %v216 = vsel %vm193, %v72, 0
    %v219 = vsel %vm193, %v73, 0
    %v222 = vsel %vm193, %v74, 0
    %v225 = vsel %vm193, %v75, 0
    %v228 = vsel %vm193, %v76, 0
    %v231 = vsel %vm193, %v77, 0
    %v234 = vsel %vm193, %v78, 0
    %v237 = vsel %vm193, %v79, 0
    %v240 = vsel %vm193, %v80, 0
    %v243 = vsel %vm193, %v81, 0
    %v246 = vsel %vm193, %v82, 0
    %v249 = vsel %vm193, %v83, 0
    %v252 = vsel %vm193, %v84, 0
    %v255 = vsel %vm193, %v85, 0
    %v258 = vsel %vm193, %v86, 0
    %v261 = vsel %vm193, %v87, 0
    %v264 = vsel %vm193, %v88, 0
    %v267 = vsel %vm193, %v89, 0
    %v270 = vsel %vm193, %v90, 0
    %v273 = vsel %vm193, %v91, 0
    %v276 = vsel %vm193, %v92, 0
    %v279 = vsel %vm193, %v93, 0
    %v282 = vsel %vm193, %v94, 0
    %v285 = vsel %vm193, %v95, 0
    %v288 = vsel %vm193, %v96, 0
    %v291 = vsel %vm193, %v97, 0
    %v294 = vsel %vm193, %v98, 0
    %v297 = vsel %vm193, %v99, 0
    %v300 = vsel %vm193, %v100, 0
    %v303 = vsel %vm193, %v101, 0
    %v306 = vsel %vm193, %v102, 0
    %v309 = vsel %vm193, %v103, 0
    %v312 = vsel %vm193, %v104, 0
    %v315 = vsel %vm193, %v105, 0
    %v318 = vsel %vm193, %v106, 0
    %v321 = vsel %vm193, %v107, 0
    %v324 = vsel %vm193, %v108, 0
    %v327 = vsel %vm193, %v109, 0
    %v330 = vsel %vm193, %v110, 0
    %v333 = vsel %vm193, %v111, 0
    %v336 = vsel %vm193, %v112, 0
    %v339 = vsel %vm193, %v113, 0
    %v342 = vsel %vm193, %v114, 0
    %v345 = vsel %vm193, %v115, 0
    %v348 = vsel %vm193, %v116, 0
    %v351 = vsel %vm193, %v117, 0
    %v354 = vsel %vm193, %v118, 0
    %v357 = vsel %vm193, %v119, 0
    %v360 = vsel %vm193, %v120, 0
    %v363 = vsel %vm193, %v121, 0
    %v366 = vsel %vm193, %v122, 0
    %v369 = vsel %vm193, %v123, 0
    %v372 = vsel %vm193, %v124, 0
    %v375 = vsel %vm193, %v125, 0
    %v378 = vsel %vm193, %v126, 0
    %v381 = vsel %vm193, %v127, 0
    %v384 = vsel %vm193, %v128, 0
    %v387 = vsel %vm193, %v129, 0
    %v390 = vsel %vm193, %v130, 0
    %v393 = vsel %vm193, %v131, 0
    %v396 = vsel %vm193, %v132, 0
    %v399 = vsel %vm193, %v133, 0
    %v402 = vsel %vm193, %v134, 0
    %v405 = vsel %vm193, %v135, 0
    %v408 = vsel %vm193, %v136, 0
    %v411 = vsel %vm193, %v137, 0
    %v414 = vsel %vm193, %v138, 0
    %v417 = vsel %vm193, %v139, 0
    %v420 = vsel %vm193, %v140, 0
    %v423 = vsel %vm193, %v141, 0
    %v426 = vsel %vm193, %v142, 0
    %v429 = vsel %vm193, %v143, 0
    %v432 = vsel %vm193, %v144, 0
    %v435 = vsel %vm193, %v145, 0
    %v438 = vsel %vm193, %v146, 0
    %v441 = vsel %vm193, %v147, 0
    %v444 = vsel %vm193, %v148, 0
    %v447 = vsel %vm193, %v149, 0
    %v450 = vsel %vm193, %v150, 0
    %v453 = vsel %vm193, %v151, 0
    %v456 = vsel %vm193, %v152, 0
    %v459 = vsel %vm193, %v153, 0
    %v462 = vsel %vm193, %v154, 0
    %v465 = vsel %vm193, %v155, 0
    %v468 = vsel %vm193, %v156, 0
    %v471 = vsel %vm193, %v157, 0
    %v474 = vsel %vm193, %v158, 0
    %v477 = vsel %vm193, %v159, 0
    %v480 = vsel %vm193, %v160, 0
    %v483 = vsel %vm193, %v161, 0
    %v486 = vsel %vm193, %v162, 0
    %v489 = vsel %vm193, %v163, 0
    %v492 = vsel %vm193, %v164, 0
    %v495 = vsel %vm193, %v165, 0
    %v498 = vsel %vm193, %v166, 0
    %v501 = vsel %vm193, %v167, 0
    %v504 = vsel %vm193, %v168, 0
    %v507 = vsel %vm193, %v169, 0
    %v510 = vsel %vm193, %v170, 0
    %v513 = vsel %vm193, %v171, 0
    %v516 = vsel %vm193, %v172, 0
    %v519 = vsel %vm193, %v173, 0
    %v522 = vsel %vm193, %v174, 0
    %v525 = vsel %vm193, %v175, 0
    %v528 = vsel %vm193, %v176, 0
    %v531 = vsel %vm193, %v177, 0
    %v534 = vsel %vm193, %v178, 0
    %v537 = vsel %vm193, %v179, 0
    %v540 = vsel %vm193, %v180, 0
    %v543 = vsel %vm193, %v181, 0
    %v546 = vsel %vm193, %v182, 0
    %v549 = vsel %vm193, %v183, 0
    %v552 = vsel %vm193, %v184, 0
    %v555 = vsel %vm193, %v185, 0
    %v558 = vsel %vm193, %v186, 0
    %v561 = vsel %vm193, %v187, 0
    %v564 = vsel %vm193, %v188, 0
    %v567 = vsel %vm193, %v189, 0
    %v570 = vsel %vm193, %v190, 0
    %v573 = vsel %vm193, %v191, 0
    %v576 = vsel %vm193, %v192, 0
    %578 = vmatprep.subr.mxu0 0.0
    %579 = vmatpush1.msra.mxu0 0.0
    %580 = vmatprep.subr.mxu0 0.0
    %581 = vmatpush1.msra.mxu0 0.0
    %582 = vmatprep.subr.mxu0 0.0
    %583 = vmatpush1.msra.mxu0 0.0
    %584 = vmatprep.subr.mxu0 0.0
    %585 = vmatpush1.msra.mxu0 0.0
    %586 = vmatprep.subr.mxu0 0.0
    %587 = vmatpush1.msra.mxu0 0.0
    %588 = vmatprep.subr.mxu0 0.0
    %589 = vmatpush1.msra.mxu0 0.0
    %590 = vmatprep.subr.mxu0 0.0
    %591 = vmatpush1.msra.mxu0 0.0
    %592 = vmatprep.subr.mxu0 0.0
    %593 = vmatpush1.msra.mxu0 0.0
    %594 = vmatprep.subr.mxu0 0.0
    %595 = vmatpush1.msra.mxu0 0.0
    %596 = vmatprep.subr.mxu0 0.0
    %597 = vmatpush1.msra.mxu0 0.0
    %598 = vmatprep.subr.mxu0 0.0
    %599 = vmatpush1.msra.mxu0 0.0
    %600 = vmatprep.subr.mxu0 0.0
    %601 = vmatpush1.msra.mxu0 0.0
    %602 = vmatprep.subr.mxu0 0.0
    %603 = vmatpush1.msra.mxu0 %v29
    %604 = vmatprep.subr.mxu0 0.0
    %605 = vmatpush1.msra.mxu0 %v28
    %606 = vmatprep.subr.mxu0 0.0
    %607 = vmatpush1.msra.mxu0 %v27
    %608 = vmatprep.subr.mxu0 0.0
    %609 = vmatpush1.msra.mxu0 %v26
    %610 = vmatprep.subr.mxu0 0.0
    %611 = vmatpush2.msra.mxu0 0.0
    %612 = vmatprep.subr.mxu0 0.0
    %613 = vmatpush2.msra.mxu0 0.0
    %614 = vmatprep.subr.mxu0 0.0
    %615 = vmatpush2.msra.mxu0 0.0
    %616 = vmatprep.subr.mxu0 0.0
    %617 = vmatpush2.msra.mxu0 0.0
    %618 = vmatprep.subr.mxu0 0.0
    %619 = vmatpush2.msra.mxu0 0.0
    %620 = vmatprep.subr.mxu0 0.0
    %621 = vmatpush2.msra.mxu0 0.0
    %622 = vmatprep.subr.mxu0 0.0
    %623 = vmatpush2.msra.mxu0 0.0
    %624 = vmatprep.subr.mxu0 0.0
    %625 = vmatpush2.msra.mxu0 0.0
    %626 = vmatprep.subr.mxu0 0.0
    %627 = vmatpush2.msra.mxu0 0.0
    %628 = vmatprep.subr.mxu0 0.0
    %629 = vmatpush2.msra.mxu0 0.0
    %630 = vmatprep.subr.mxu0 0.0
    %631 = vmatpush2.msra.mxu0 0.0
    %632 = vmatprep.subr.mxu0 0.0
    %633 = vmatpush2.msra.mxu0 0.0
    %634 = vmatprep.subr.mxu0 0.0
    %635 = vmatpush2.msra.mxu0 0.0
    %636 = vmatprep.subr.mxu0 0.0
    %637 = vmatpush2.msra.mxu0 0.0
    %638 = vmatprep.subr.mxu0 0.0
    %639 = vmatpush2.msra.mxu0 0.0
    %640 = vmatprep.subr.mxu0 0.0
    %641 = vmatpush2.msra.mxu0 0.0
    %642 = vmatprep.mubr.f32.mxu0 0.0
    %643 = vmatmul.mubr.f32.gmra.mxu0 %v195
    %v644 = vpop.f32.mrf.mxu0
    %v645 = vadd.f32 0.0, %v644
    %v646 = vpop.f32.mrf.mxu0
    %647 = vmatprep.mubr.f32.mxu0 0.0
    %648 = vmatmul.mubr.f32.gmra.mxu0 %v198
    %v649 = vpop.f32.mrf.mxu0
    %v650 = vadd.f32 0.0, %v649
    %v651 = vpop.f32.mrf.mxu0
    %652 = vmatprep.mubr.f32.mxu0 0.0
    %653 = vmatmul.mubr.f32.gmra.mxu0 %v201
    %v654 = vpop.f32.mrf.mxu0
    %v655 = vadd.f32 0.0, %v654
    %v656 = vpop.f32.mrf.mxu0
    %657 = vmatprep.mubr.f32.mxu0 0.0
    %658 = vmatmul.mubr.f32.gmra.mxu0 %v204
    %v659 = vpop.f32.mrf.mxu0
    %v660 = vadd.f32 0.0, %v659
    %v661 = vpop.f32.mrf.mxu0
    %662 = vmatprep.mubr.f32.mxu0 0.0
    %663 = vmatmul.mubr.f32.gmra.mxu0 %v207
    %v664 = vpop.f32.mrf.mxu0
    %v665 = vadd.f32 0.0, %v664
    %v666 = vpop.f32.mrf.mxu0
    %667 = vmatprep.mubr.f32.mxu0 0.0
    %668 = vmatmul.mubr.f32.gmra.mxu0 %v210
    %v669 = vpop.f32.mrf.mxu0
    %v670 = vadd.f32 0.0, %v669
    %v671 = vpop.f32.mrf.mxu0
    %672 = vmatprep.mubr.f32.mxu0 0.0
    %673 = vmatmul.mubr.f32.gmra.mxu0 %v213
    %v674 = vpop.f32.mrf.mxu0
    %v675 = vadd.f32 0.0, %v674
    %v676 = vpop.f32.mrf.mxu0
    %677 = vmatprep.mubr.f32.mxu0 0.0
    %678 = vmatmul.mubr.f32.gmra.mxu0 %v216
    %v679 = vpop.f32.mrf.mxu0
    %v680 = vadd.f32 0.0, %v679
    %v681 = vpop.f32.mrf.mxu0
    %682 = vmatprep.mubr.f32.mxu0 0.0
    %683 = vmatmul.mubr.f32.gmra.mxu0 %v219
    %v684 = vpop.f32.mrf.mxu0
    %v685 = vadd.f32 0.0, %v684
    %v686 = vpop.f32.mrf.mxu0
    %687 = vmatprep.mubr.f32.mxu0 0.0
    %688 = vmatmul.mubr.f32.gmra.mxu0 %v222
    %v689 = vpop.f32.mrf.mxu0
    %v690 = vadd.f32 0.0, %v689
    %v691 = vpop.f32.mrf.mxu0
    %692 = vmatprep.mubr.f32.mxu0 0.0
    %693 = vmatmul.mubr.f32.gmra.mxu0 %v225
    %v694 = vpop.f32.mrf.mxu0
    %v695 = vadd.f32 0.0, %v694
    %v696 = vpop.f32.mrf.mxu0
    %697 = vmatprep.mubr.f32.mxu0 0.0
    %698 = vmatmul.mubr.f32.gmra.mxu0 %v228
    %v699 = vpop.f32.mrf.mxu0
    %v700 = vadd.f32 0.0, %v699
    %v701 = vpop.f32.mrf.mxu0
    %702 = vmatprep.mubr.f32.mxu0 0.0
    %703 = vmatmul.mubr.f32.gmra.mxu0 %v231
    %v704 = vpop.f32.mrf.mxu0
    %v705 = vadd.f32 0.0, %v704
    %v706 = vpop.f32.mrf.mxu0
    %707 = vmatprep.mubr.f32.mxu0 0.0
    %708 = vmatmul.mubr.f32.gmra.mxu0 %v234
    %v709 = vpop.f32.mrf.mxu0
    %v710 = vadd.f32 0.0, %v709
    %v711 = vpop.f32.mrf.mxu0
    %712 = vmatprep.mubr.f32.mxu0 0.0
    %713 = vmatmul.mubr.f32.gmra.mxu0 %v237
    %v714 = vpop.f32.mrf.mxu0
    %v715 = vadd.f32 0.0, %v714
    %v716 = vpop.f32.mrf.mxu0
    %717 = vmatprep.mubr.f32.mxu0 0.0
    %718 = vmatmul.mubr.f32.gmra.mxu0 %v240
    %v719 = vpop.f32.mrf.mxu0
    %v720 = vadd.f32 0.0, %v719
    %v721 = vpop.f32.mrf.mxu0
    %722 = vmatprep.mubr.f32.mxu0 0.0
    %723 = vmatmul.mubr.f32.gmra.mxu0 %v243
    %v724 = vpop.f32.mrf.mxu0
    %v725 = vadd.f32 0.0, %v724
    %v726 = vpop.f32.mrf.mxu0
    %727 = vmatprep.mubr.f32.mxu0 0.0
    %728 = vmatmul.mubr.f32.gmra.mxu0 %v246
    %v729 = vpop.f32.mrf.mxu0
    %v730 = vadd.f32 0.0, %v729
    %v731 = vpop.f32.mrf.mxu0
    %732 = vmatprep.mubr.f32.mxu0 0.0
    %733 = vmatmul.mubr.f32.gmra.mxu0 %v249
    %v734 = vpop.f32.mrf.mxu0
    %v735 = vadd.f32 0.0, %v734
    %v736 = vpop.f32.mrf.mxu0
    %737 = vmatprep.mubr.f32.mxu0 0.0
    %738 = vmatmul.mubr.f32.gmra.mxu0 %v252
    %v739 = vpop.f32.mrf.mxu0
    %v740 = vadd.f32 0.0, %v739
    %v741 = vpop.f32.mrf.mxu0
    %742 = vmatprep.mubr.f32.mxu0 0.0
    %743 = vmatmul.mubr.f32.gmra.mxu0 %v255
    %v744 = vpop.f32.mrf.mxu0
    %v745 = vadd.f32 0.0, %v744
    %v746 = vpop.f32.mrf.mxu0
    %747 = vmatprep.mubr.f32.mxu0 0.0
    %748 = vmatmul.mubr.f32.gmra.mxu0 %v258
    %v749 = vpop.f32.mrf.mxu0
    %v750 = vadd.f32 0.0, %v749
    %v751 = vpop.f32.mrf.mxu0
    %752 = vmatprep.mubr.f32.mxu0 0.0
    %753 = vmatmul.mubr.f32.gmra.mxu0 %v261
    %v754 = vpop.f32.mrf.mxu0
    %v755 = vadd.f32 0.0, %v754
    %v756 = vpop.f32.mrf.mxu0
    %757 = vmatprep.mubr.f32.mxu0 0.0
    %758 = vmatmul.mubr.f32.gmra.mxu0 %v264
    %v759 = vpop.f32.mrf.mxu0
    %v760 = vadd.f32 0.0, %v759
    %v761 = vpop.f32.mrf.mxu0
    %762 = vmatprep.mubr.f32.mxu0 0.0
    %763 = vmatmul.mubr.f32.gmra.mxu0 %v267
    %v764 = vpop.f32.mrf.mxu0
    %v765 = vadd.f32 0.0, %v764
    %v766 = vpop.f32.mrf.mxu0
    %767 = vmatprep.mubr.f32.mxu0 0.0
    %768 = vmatmul.mubr.f32.gmra.mxu0 %v270
    %v769 = vpop.f32.mrf.mxu0
    %v770 = vadd.f32 0.0, %v769
    %v771 = vpop.f32.mrf.mxu0
    %772 = vmatprep.mubr.f32.mxu0 0.0
    %773 = vmatmul.mubr.f32.gmra.mxu0 %v273
    %v774 = vpop.f32.mrf.mxu0
    %v775 = vadd.f32 0.0, %v774
    %v776 = vpop.f32.mrf.mxu0
    %777 = vmatprep.mubr.f32.mxu0 0.0
    %778 = vmatmul.mubr.f32.gmra.mxu0 %v276
    %v779 = vpop.f32.mrf.mxu0
    %v780 = vadd.f32 0.0, %v779
    %v781 = vpop.f32.mrf.mxu0
    %782 = vmatprep.mubr.f32.mxu0 0.0
    %783 = vmatmul.mubr.f32.gmra.mxu0 %v279
    %v784 = vpop.f32.mrf.mxu0
    %v785 = vadd.f32 0.0, %v784
    %v786 = vpop.f32.mrf.mxu0
    %787 = vmatprep.mubr.f32.mxu0 0.0
    %788 = vmatmul.mubr.f32.gmra.mxu0 %v282
    %v789 = vpop.f32.mrf.mxu0
    %v790 = vadd.f32 0.0, %v789
    %v791 = vpop.f32.mrf.mxu0
    %792 = vmatprep.mubr.f32.mxu0 0.0
    %793 = vmatmul.mubr.f32.gmra.mxu0 %v285
    %v794 = vpop.f32.mrf.mxu0
    %v795 = vadd.f32 0.0, %v794
    %v796 = vpop.f32.mrf.mxu0
    %797 = vmatprep.mubr.f32.mxu0 0.0
    %798 = vmatmul.mubr.f32.gmra.mxu0 %v288
    %v799 = vpop.f32.mrf.mxu0
    %v800 = vadd.f32 0.0, %v799
    %v801 = vpop.f32.mrf.mxu0
    %802 = vmatprep.mubr.f32.mxu0 0.0
    %803 = vmatmul.mubr.f32.gmra.mxu0 %v291
    %v804 = vpop.f32.mrf.mxu0
    %v805 = vadd.f32 0.0, %v804
    %v806 = vpop.f32.mrf.mxu0
    %807 = vmatprep.mubr.f32.mxu0 0.0
    %808 = vmatmul.mubr.f32.gmra.mxu0 %v294
    %v809 = vpop.f32.mrf.mxu0
    %v810 = vadd.f32 0.0, %v809
    %v811 = vpop.f32.mrf.mxu0
    %812 = vmatprep.mubr.f32.mxu0 0.0
    %813 = vmatmul.mubr.f32.gmra.mxu0 %v297
    %v814 = vpop.f32.mrf.mxu0
    %v815 = vadd.f32 0.0, %v814
    %v816 = vpop.f32.mrf.mxu0
    %817 = vmatprep.mubr.f32.mxu0 0.0
    %818 = vmatmul.mubr.f32.gmra.mxu0 %v300
    %v819 = vpop.f32.mrf.mxu0
    %v820 = vadd.f32 0.0, %v819
    %v821 = vpop.f32.mrf.mxu0
    %822 = vmatprep.mubr.f32.mxu0 0.0
    %823 = vmatmul.mubr.f32.gmra.mxu0 %v303
    %v824 = vpop.f32.mrf.mxu0
    %v825 = vadd.f32 0.0, %v824
    %v826 = vpop.f32.mrf.mxu0
    %827 = vmatprep.mubr.f32.mxu0 0.0
    %828 = vmatmul.mubr.f32.gmra.mxu0 %v306
    %v829 = vpop.f32.mrf.mxu0
    %v830 = vadd.f32 0.0, %v829
    %v831 = vpop.f32.mrf.mxu0
    %832 = vmatprep.mubr.f32.mxu0 0.0
    %833 = vmatmul.mubr.f32.gmra.mxu0 %v309
    %v834 = vpop.f32.mrf.mxu0
    %v835 = vadd.f32 0.0, %v834
    %v836 = vpop.f32.mrf.mxu0
    %837 = vmatprep.mubr.f32.mxu0 0.0
    %838 = vmatmul.mubr.f32.gmra.mxu0 %v312
    %v839 = vpop.f32.mrf.mxu0
    %v840 = vadd.f32 0.0, %v839
    %v841 = vpop.f32.mrf.mxu0
    %842 = vmatprep.mubr.f32.mxu0 0.0
    %843 = vmatmul.mubr.f32.gmra.mxu0 %v315
    %v844 = vpop.f32.mrf.mxu0
    %v845 = vadd.f32 0.0, %v844
    %v846 = vpop.f32.mrf.mxu0
    %847 = vmatprep.mubr.f32.mxu0 0.0
    %848 = vmatmul.mubr.f32.gmra.mxu0 %v318
    %v849 = vpop.f32.mrf.mxu0
    %v850 = vadd.f32 0.0, %v849
    %v851 = vpop.f32.mrf.mxu0
    %852 = vmatprep.mubr.f32.mxu0 0.0
    %853 = vmatmul.mubr.f32.gmra.mxu0 %v321
    %v854 = vpop.f32.mrf.mxu0
    %v855 = vadd.f32 0.0, %v854
    %v856 = vpop.f32.mrf.mxu0
    %857 = vmatprep.mubr.f32.mxu0 0.0
    %858 = vmatmul.mubr.f32.gmra.mxu0 %v324
    %v859 = vpop.f32.mrf.mxu0
    %v860 = vadd.f32 0.0, %v859
    %v861 = vpop.f32.mrf.mxu0
    %862 = vmatprep.mubr.f32.mxu0 0.0
    %863 = vmatmul.mubr.f32.gmra.mxu0 %v327
    %v864 = vpop.f32.mrf.mxu0
    %v865 = vadd.f32 0.0, %v864
    %v866 = vpop.f32.mrf.mxu0
    %867 = vmatprep.mubr.f32.mxu0 0.0
    %868 = vmatmul.mubr.f32.gmra.mxu0 %v330
    %v869 = vpop.f32.mrf.mxu0
    %v870 = vadd.f32 0.0, %v869
    %v871 = vpop.f32.mrf.mxu0
    %872 = vmatprep.mubr.f32.mxu0 0.0
    %873 = vmatmul.mubr.f32.gmra.mxu0 %v333
    %v874 = vpop.f32.mrf.mxu0
    %v875 = vadd.f32 0.0, %v874
    %v876 = vpop.f32.mrf.mxu0
    %877 = vmatprep.mubr.f32.mxu0 0.0
    %878 = vmatmul.mubr.f32.gmra.mxu0 %v336
    %v879 = vpop.f32.mrf.mxu0
    %v880 = vadd.f32 0.0, %v879
    %v881 = vpop.f32.mrf.mxu0
    %882 = vmatprep.mubr.f32.mxu0 0.0
    %883 = vmatmul.mubr.f32.gmra.mxu0 %v339
    %v884 = vpop.f32.mrf.mxu0
    %v885 = vadd.f32 0.0, %v884
    %v886 = vpop.f32.mrf.mxu0
    %887 = vmatprep.mubr.f32.mxu0 0.0
    %888 = vmatmul.mubr.f32.gmra.mxu0 %v342
    %v889 = vpop.f32.mrf.mxu0
    %v890 = vadd.f32 0.0, %v889
    %v891 = vpop.f32.mrf.mxu0
    %892 = vmatprep.mubr.f32.mxu0 0.0
    %893 = vmatmul.mubr.f32.gmra.mxu0 %v345
    %v894 = vpop.f32.mrf.mxu0
    %v895 = vadd.f32 0.0, %v894
    %v896 = vpop.f32.mrf.mxu0
    %897 = vmatprep.mubr.f32.mxu0 0.0
    %898 = vmatmul.mubr.f32.gmra.mxu0 %v348
    %v899 = vpop.f32.mrf.mxu0
    %v900 = vadd.f32 0.0, %v899
    %v901 = vpop.f32.mrf.mxu0
    %902 = vmatprep.mubr.f32.mxu0 0.0
    %903 = vmatmul.mubr.f32.gmra.mxu0 %v351
    %v904 = vpop.f32.mrf.mxu0
    %v905 = vadd.f32 0.0, %v904
    %v906 = vpop.f32.mrf.mxu0
    %907 = vmatprep.mubr.f32.mxu0 0.0
    %908 = vmatmul.mubr.f32.gmra.mxu0 %v354
    %v909 = vpop.f32.mrf.mxu0
    %v910 = vadd.f32 0.0, %v909
    %v911 = vpop.f32.mrf.mxu0
    %912 = vmatprep.mubr.f32.mxu0 0.0
    %913 = vmatmul.mubr.f32.gmra.mxu0 %v357
    %v914 = vpop.f32.mrf.mxu0
    %v915 = vadd.f32 0.0, %v914
    %v916 = vpop.f32.mrf.mxu0
    %917 = vmatprep.mubr.f32.mxu0 0.0
    %918 = vmatmul.mubr.f32.gmra.mxu0 %v360
    %v919 = vpop.f32.mrf.mxu0
    %v920 = vadd.f32 0.0, %v919
    %v921 = vpop.f32.mrf.mxu0
    %922 = vmatprep.mubr.f32.mxu0 0.0
    %923 = vmatmul.mubr.f32.gmra.mxu0 %v363
    %v924 = vpop.f32.mrf.mxu0
    %v925 = vadd.f32 0.0, %v924
    %v926 = vpop.f32.mrf.mxu0
    %927 = vmatprep.mubr.f32.mxu0 0.0
    %928 = vmatmul.mubr.f32.gmra.mxu0 %v366
    %v929 = vpop.f32.mrf.mxu0
    %v930 = vadd.f32 0.0, %v929
    %v931 = vpop.f32.mrf.mxu0
    %932 = vmatprep.mubr.f32.mxu0 0.0
    %933 = vmatmul.mubr.f32.gmra.mxu0 %v369
    %v934 = vpop.f32.mrf.mxu0
    %v935 = vadd.f32 0.0, %v934
    %v936 = vpop.f32.mrf.mxu0
    %937 = vmatprep.mubr.f32.mxu0 0.0
    %938 = vmatmul.mubr.f32.gmra.mxu0 %v372
    %v939 = vpop.f32.mrf.mxu0
    %v940 = vadd.f32 0.0, %v939
    %v941 = vpop.f32.mrf.mxu0
    %942 = vmatprep.mubr.f32.mxu0 0.0
    %943 = vmatmul.mubr.f32.gmra.mxu0 %v375
    %v944 = vpop.f32.mrf.mxu0
    %v945 = vadd.f32 0.0, %v944
    %v946 = vpop.f32.mrf.mxu0
    %947 = vmatprep.mubr.f32.mxu0 0.0
    %948 = vmatmul.mubr.f32.gmra.mxu0 %v378
    %v949 = vpop.f32.mrf.mxu0
    %v950 = vadd.f32 0.0, %v949
    %v951 = vpop.f32.mrf.mxu0
    %952 = vmatprep.mubr.f32.mxu0 0.0
    %953 = vmatmul.mubr.f32.gmra.mxu0 %v381
    %v954 = vpop.f32.mrf.mxu0
    %v955 = vadd.f32 0.0, %v954
    %v956 = vpop.f32.mrf.mxu0
    %957 = vmatprep.mubr.f32.mxu0 0.0
    %958 = vmatmul.mubr.f32.gmra.mxu0 %v384
    %v959 = vpop.f32.mrf.mxu0
    %v960 = vadd.f32 0.0, %v959
    %v961 = vpop.f32.mrf.mxu0
    %962 = vmatprep.mubr.f32.mxu0 0.0
    %963 = vmatmul.mubr.f32.gmra.mxu0 %v387
    %v964 = vpop.f32.mrf.mxu0
    %v965 = vadd.f32 0.0, %v964
    %v966 = vpop.f32.mrf.mxu0
    %967 = vmatprep.mubr.f32.mxu0 0.0
    %968 = vmatmul.mubr.f32.gmra.mxu0 %v390
    %v969 = vpop.f32.mrf.mxu0
    %v970 = vadd.f32 0.0, %v969
    %v971 = vpop.f32.mrf.mxu0
    %972 = vmatprep.mubr.f32.mxu0 0.0
    %973 = vmatmul.mubr.f32.gmra.mxu0 %v393
    %v974 = vpop.f32.mrf.mxu0
    %v975 = vadd.f32 0.0, %v974
    %v976 = vpop.f32.mrf.mxu0
    %977 = vmatprep.mubr.f32.mxu0 0.0
    %978 = vmatmul.mubr.f32.gmra.mxu0 %v396
    %v979 = vpop.f32.mrf.mxu0
    %v980 = vadd.f32 0.0, %v979
    %v981 = vpop.f32.mrf.mxu0
    %982 = vmatprep.mubr.f32.mxu0 0.0
    %983 = vmatmul.mubr.f32.gmra.mxu0 %v399
    %v984 = vpop.f32.mrf.mxu0
    %v985 = vadd.f32 0.0, %v984
    %v986 = vpop.f32.mrf.mxu0
    %987 = vmatprep.mubr.f32.mxu0 0.0
    %988 = vmatmul.mubr.f32.gmra.mxu0 %v402
    %v989 = vpop.f32.mrf.mxu0
    %v990 = vadd.f32 0.0, %v989
    %v991 = vpop.f32.mrf.mxu0
    %992 = vmatprep.mubr.f32.mxu0 0.0
    %993 = vmatmul.mubr.f32.gmra.mxu0 %v405
    %v994 = vpop.f32.mrf.mxu0
    %v995 = vadd.f32 0.0, %v994
    %v996 = vpop.f32.mrf.mxu0
    %997 = vmatprep.mubr.f32.mxu0 0.0
    %998 = vmatmul.mubr.f32.gmra.mxu0 %v408
    %v999 = vpop.f32.mrf.mxu0
    %v1000 = vadd.f32 0.0, %v999
    %v1001 = vpop.f32.mrf.mxu0
    %1002 = vmatprep.mubr.f32.mxu0 0.0
    %1003 = vmatmul.mubr.f32.gmra.mxu0 %v411
    %v1004 = vpop.f32.mrf.mxu0
    %v1005 = vadd.f32 0.0, %v1004
    %v1006 = vpop.f32.mrf.mxu0
    %1007 = vmatprep.mubr.f32.mxu0 0.0
    %1008 = vmatmul.mubr.f32.gmra.mxu0 %v414
    %v1009 = vpop.f32.mrf.mxu0
    %v1010 = vadd.f32 0.0, %v1009
    %v1011 = vpop.f32.mrf.mxu0
    %1012 = vmatprep.mubr.f32.mxu0 0.0
    %1013 = vmatmul.mubr.f32.gmra.mxu0 %v417
    %v1014 = vpop.f32.mrf.mxu0
    %v1015 = vadd.f32 0.0, %v1014
    %v1016 = vpop.f32.mrf.mxu0
    %1017 = vmatprep.mubr.f32.mxu0 0.0
    %1018 = vmatmul.mubr.f32.gmra.mxu0 %v420
    %v1019 = vpop.f32.mrf.mxu0
    %v1020 = vadd.f32 0.0, %v1019
    %v1021 = vpop.f32.mrf.mxu0
    %1022 = vmatprep.mubr.f32.mxu0 0.0
    %1023 = vmatmul.mubr.f32.gmra.mxu0 %v423
    %v1024 = vpop.f32.mrf.mxu0
    %v1025 = vadd.f32 0.0, %v1024
    %v1026 = vpop.f32.mrf.mxu0
    %1027 = vmatprep.mubr.f32.mxu0 0.0
    %1028 = vmatmul.mubr.f32.gmra.mxu0 %v426
    %v1029 = vpop.f32.mrf.mxu0
    %v1030 = vadd.f32 0.0, %v1029
    %v1031 = vpop.f32.mrf.mxu0
    %1032 = vmatprep.mubr.f32.mxu0 0.0
    %1033 = vmatmul.mubr.f32.gmra.mxu0 %v429
    %v1034 = vpop.f32.mrf.mxu0
    %v1035 = vadd.f32 0.0, %v1034
    %v1036 = vpop.f32.mrf.mxu0
    %1037 = vmatprep.mubr.f32.mxu0 0.0
    %1038 = vmatmul.mubr.f32.gmra.mxu0 %v432
    %v1039 = vpop.f32.mrf.mxu0
    %v1040 = vadd.f32 0.0, %v1039
    %v1041 = vpop.f32.mrf.mxu0
    %1042 = vmatprep.mubr.f32.mxu0 0.0
    %1043 = vmatmul.mubr.f32.gmra.mxu0 %v435
    %v1044 = vpop.f32.mrf.mxu0
    %v1045 = vadd.f32 0.0, %v1044
    %v1046 = vpop.f32.mrf.mxu0
    %1047 = vmatprep.mubr.f32.mxu0 0.0
    %1048 = vmatmul.mubr.f32.gmra.mxu0 %v438
    %v1049 = vpop.f32.mrf.mxu0
    %v1050 = vadd.f32 0.0, %v1049
    %v1051 = vpop.f32.mrf.mxu0
    %1052 = vmatprep.mubr.f32.mxu0 0.0
    %1053 = vmatmul.mubr.f32.gmra.mxu0 %v441
    %v1054 = vpop.f32.mrf.mxu0
    %v1055 = vadd.f32 0.0, %v1054
    %v1056 = vpop.f32.mrf.mxu0
    %1057 = vmatprep.mubr.f32.mxu0 0.0
    %1058 = vmatmul.mubr.f32.gmra.mxu0 %v444
    %v1059 = vpop.f32.mrf.mxu0
    %v1060 = vadd.f32 0.0, %v1059
    %v1061 = vpop.f32.mrf.mxu0
    %1062 = vmatprep.mubr.f32.mxu0 0.0
    %1063 = vmatmul.mubr.f32.gmra.mxu0 %v447
    %v1064 = vpop.f32.mrf.mxu0
    %v1065 = vadd.f32 0.0, %v1064
    %v1066 = vpop.f32.mrf.mxu0
    %1067 = vmatprep.mubr.f32.mxu0 0.0
    %1068 = vmatmul.mubr.f32.gmra.mxu0 %v450
    %v1069 = vpop.f32.mrf.mxu0
    %v1070 = vadd.f32 0.0, %v1069
    %v1071 = vpop.f32.mrf.mxu0
    %1072 = vmatprep.mubr.f32.mxu0 0.0
    %1073 = vmatmul.mubr.f32.gmra.mxu0 %v453
    %v1074 = vpop.f32.mrf.mxu0
    %v1075 = vadd.f32 0.0, %v1074
    %v1076 = vpop.f32.mrf.mxu0
    %1077 = vmatprep.mubr.f32.mxu0 0.0
    %1078 = vmatmul.mubr.f32.gmra.mxu0 %v456
    %v1079 = vpop.f32.mrf.mxu0
    %v1080 = vadd.f32 0.0, %v1079
    %v1081 = vpop.f32.mrf.mxu0
    %1082 = vmatprep.mubr.f32.mxu0 0.0
    %1083 = vmatmul.mubr.f32.gmra.mxu0 %v459
    %v1084 = vpop.f32.mrf.mxu0
    %v1085 = vadd.f32 0.0, %v1084
    %v1086 = vpop.f32.mrf.mxu0
    %1087 = vmatprep.mubr.f32.mxu0 0.0
    %1088 = vmatmul.mubr.f32.gmra.mxu0 %v462
    %v1089 = vpop.f32.mrf.mxu0
    %v1090 = vadd.f32 0.0, %v1089
    %v1091 = vpop.f32.mrf.mxu0
    %1092 = vmatprep.mubr.f32.mxu0 0.0
    %1093 = vmatmul.mubr.f32.gmra.mxu0 %v465
    %v1094 = vpop.f32.mrf.mxu0
    %v1095 = vadd.f32 0.0, %v1094
    %v1096 = vpop.f32.mrf.mxu0
    %1097 = vmatprep.mubr.f32.mxu0 0.0
    %1098 = vmatmul.mubr.f32.gmra.mxu0 %v468
    %v1099 = vpop.f32.mrf.mxu0
    %v1100 = vadd.f32 0.0, %v1099
    %v1101 = vpop.f32.mrf.mxu0
    %1102 = vmatprep.mubr.f32.mxu0 0.0
    %1103 = vmatmul.mubr.f32.gmra.mxu0 %v471
    %v1104 = vpop.f32.mrf.mxu0
    %v1105 = vadd.f32 0.0, %v1104
    %v1106 = vpop.f32.mrf.mxu0
    %1107 = vmatprep.mubr.f32.mxu0 0.0
    %1108 = vmatmul.mubr.f32.gmra.mxu0 %v474
    %v1109 = vpop.f32.mrf.mxu0
    %v1110 = vadd.f32 0.0, %v1109
    %v1111 = vpop.f32.mrf.mxu0
    %1112 = vmatprep.mubr.f32.mxu0 0.0
    %1113 = vmatmul.mubr.f32.gmra.mxu0 %v477
    %v1114 = vpop.f32.mrf.mxu0
    %v1115 = vadd.f32 0.0, %v1114
    %v1116 = vpop.f32.mrf.mxu0
    %1117 = vmatprep.mubr.f32.mxu0 0.0
    %1118 = vmatmul.mubr.f32.gmra.mxu0 %v480
    %v1119 = vpop.f32.mrf.mxu0
    %v1120 = vadd.f32 0.0, %v1119
    %v1121 = vpop.f32.mrf.mxu0
    %1122 = vmatprep.mubr.f32.mxu0 0.0
    %1123 = vmatmul.mubr.f32.gmra.mxu0 %v483
    %v1124 = vpop.f32.mrf.mxu0
    %v1125 = vadd.f32 0.0, %v1124
    %v1126 = vpop.f32.mrf.mxu0
    %1127 = vmatprep.mubr.f32.mxu0 0.0
    %1128 = vmatmul.mubr.f32.gmra.mxu0 %v486
    %v1129 = vpop.f32.mrf.mxu0
    %v1130 = vadd.f32 0.0, %v1129
    %v1131 = vpop.f32.mrf.mxu0
    %1132 = vmatprep.mubr.f32.mxu0 0.0
    %1133 = vmatmul.mubr.f32.gmra.mxu0 %v489
    %v1134 = vpop.f32.mrf.mxu0
    %v1135 = vadd.f32 0.0, %v1134
    %v1136 = vpop.f32.mrf.mxu0
    %1137 = vmatprep.mubr.f32.mxu0 0.0
    %1138 = vmatmul.mubr.f32.gmra.mxu0 %v492
    %v1139 = vpop.f32.mrf.mxu0
    %v1140 = vadd.f32 0.0, %v1139
    %v1141 = vpop.f32.mrf.mxu0
    %1142 = vmatprep.mubr.f32.mxu0 0.0
    %1143 = vmatmul.mubr.f32.gmra.mxu0 %v495
    %v1144 = vpop.f32.mrf.mxu0
    %v1145 = vadd.f32 0.0, %v1144
    %v1146 = vpop.f32.mrf.mxu0
    %1147 = vmatprep.mubr.f32.mxu0 0.0
    %1148 = vmatmul.mubr.f32.gmra.mxu0 %v498
    %v1149 = vpop.f32.mrf.mxu0
    %v1150 = vadd.f32 0.0, %v1149
    %v1151 = vpop.f32.mrf.mxu0
    %1152 = vmatprep.mubr.f32.mxu0 0.0
    %1153 = vmatmul.mubr.f32.gmra.mxu0 %v501
    %v1154 = vpop.f32.mrf.mxu0
    %v1155 = vadd.f32 0.0, %v1154
    %v1156 = vpop.f32.mrf.mxu0
    %1157 = vmatprep.mubr.f32.mxu0 0.0
    %1158 = vmatmul.mubr.f32.gmra.mxu0 %v504
    %v1159 = vpop.f32.mrf.mxu0
    %v1160 = vadd.f32 0.0, %v1159
    %v1161 = vpop.f32.mrf.mxu0
    %1162 = vmatprep.mubr.f32.mxu0 0.0
    %1163 = vmatmul.mubr.f32.gmra.mxu0 %v507
    %v1164 = vpop.f32.mrf.mxu0
    %v1165 = vadd.f32 0.0, %v1164
    %v1166 = vpop.f32.mrf.mxu0
    %1167 = vmatprep.mubr.f32.mxu0 0.0
    %1168 = vmatmul.mubr.f32.gmra.mxu0 %v510
    %v1169 = vpop.f32.mrf.mxu0
    %v1170 = vadd.f32 0.0, %v1169
    %v1171 = vpop.f32.mrf.mxu0
    %1172 = vmatprep.mubr.f32.mxu0 0.0
    %1173 = vmatmul.mubr.f32.gmra.mxu0 %v513
    %v1174 = vpop.f32.mrf.mxu0
    %v1175 = vadd.f32 0.0, %v1174
    %v1176 = vpop.f32.mrf.mxu0
    %1177 = vmatprep.mubr.f32.mxu0 0.0
    %1178 = vmatmul.mubr.f32.gmra.mxu0 %v516
    %v1179 = vpop.f32.mrf.mxu0
    %v1180 = vadd.f32 0.0, %v1179
    %v1181 = vpop.f32.mrf.mxu0
    %1182 = vmatprep.mubr.f32.mxu0 0.0
    %1183 = vmatmul.mubr.f32.gmra.mxu0 %v519
    %v1184 = vpop.f32.mrf.mxu0
    %v1185 = vadd.f32 0.0, %v1184
    %v1186 = vpop.f32.mrf.mxu0
    %1187 = vmatprep.mubr.f32.mxu0 0.0
    %1188 = vmatmul.mubr.f32.gmra.mxu0 %v522
    %v1189 = vpop.f32.mrf.mxu0
    %v1190 = vadd.f32 0.0, %v1189
    %v1191 = vpop.f32.mrf.mxu0
    %1192 = vmatprep.mubr.f32.mxu0 0.0
    %1193 = vmatmul.mubr.f32.gmra.mxu0 %v525
    %v1194 = vpop.f32.mrf.mxu0
    %v1195 = vadd.f32 0.0, %v1194
    %v1196 = vpop.f32.mrf.mxu0
    %1197 = vmatprep.mubr.f32.mxu0 0.0
    %1198 = vmatmul.mubr.f32.gmra.mxu0 %v528
    %v1199 = vpop.f32.mrf.mxu0
    %v1200 = vadd.f32 0.0, %v1199
    %v1201 = vpop.f32.mrf.mxu0
    %1202 = vmatprep.mubr.f32.mxu0 0.0
    %1203 = vmatmul.mubr.f32.gmra.mxu0 %v531
    %v1204 = vpop.f32.mrf.mxu0
    %v1205 = vadd.f32 0.0, %v1204
    %v1206 = vpop.f32.mrf.mxu0
    %1207 = vmatprep.mubr.f32.mxu0 0.0
    %1208 = vmatmul.mubr.f32.gmra.mxu0 %v534
    %v1209 = vpop.f32.mrf.mxu0
    %v1210 = vadd.f32 0.0, %v1209
    %v1211 = vpop.f32.mrf.mxu0
    %1212 = vmatprep.mubr.f32.mxu0 0.0
    %1213 = vmatmul.mubr.f32.gmra.mxu0 %v537
    %v1214 = vpop.f32.mrf.mxu0
    %v1215 = vadd.f32 0.0, %v1214
    %v1216 = vpop.f32.mrf.mxu0
    %1217 = vmatprep.mubr.f32.mxu0 0.0
    %1218 = vmatmul.mubr.f32.gmra.mxu0 %v540
    %v1219 = vpop.f32.mrf.mxu0
    %v1220 = vadd.f32 0.0, %v1219
    %v1221 = vpop.f32.mrf.mxu0
    %1222 = vmatprep.mubr.f32.mxu0 0.0
    %1223 = vmatmul.mubr.f32.gmra.mxu0 %v543
    %v1224 = vpop.f32.mrf.mxu0
    %v1225 = vadd.f32 0.0, %v1224
    %v1226 = vpop.f32.mrf.mxu0
    %1227 = vmatprep.mubr.f32.mxu0 0.0
    %1228 = vmatmul.mubr.f32.gmra.mxu0 %v546
    %v1229 = vpop.f32.mrf.mxu0
    %v1230 = vadd.f32 0.0, %v1229
    %v1231 = vpop.f32.mrf.mxu0
    %1232 = vmatprep.mubr.f32.mxu0 0.0
    %1233 = vmatmul.mubr.f32.gmra.mxu0 %v549
    %v1234 = vpop.f32.mrf.mxu0
    %v1235 = vadd.f32 0.0, %v1234
    %v1236 = vpop.f32.mrf.mxu0
    %1237 = vmatprep.mubr.f32.mxu0 0.0
    %1238 = vmatmul.mubr.f32.gmra.mxu0 %v552
    %v1239 = vpop.f32.mrf.mxu0
    %v1240 = vadd.f32 0.0, %v1239
    %v1241 = vpop.f32.mrf.mxu0
    %1242 = vmatprep.mubr.f32.mxu0 0.0
    %1243 = vmatmul.mubr.f32.gmra.mxu0 %v555
    %v1244 = vpop.f32.mrf.mxu0
    %v1245 = vadd.f32 0.0, %v1244
    %v1246 = vpop.f32.mrf.mxu0
    %1247 = vmatprep.mubr.f32.mxu0 0.0
    %1248 = vmatmul.mubr.f32.gmra.mxu0 %v558
    %v1249 = vpop.f32.mrf.mxu0
    %v1250 = vadd.f32 0.0, %v1249
    %v1251 = vpop.f32.mrf.mxu0
    %1252 = vmatprep.mubr.f32.mxu0 0.0
    %1253 = vmatmul.mubr.f32.gmra.mxu0 %v561
    %v1254 = vpop.f32.mrf.mxu0
    %v1255 = vadd.f32 0.0, %v1254
    %v1256 = vpop.f32.mrf.mxu0
    %1257 = vmatprep.mubr.f32.mxu0 0.0
    %1258 = vmatmul.mubr.f32.gmra.mxu0 %v564
    %v1259 = vpop.f32.mrf.mxu0
    %v1260 = vadd.f32 0.0, %v1259
    %v1261 = vpop.f32.mrf.mxu0
    %1262 = vmatprep.mubr.f32.mxu0 0.0
    %1263 = vmatmul.mubr.f32.gmra.mxu0 %v567
    %v1264 = vpop.f32.mrf.mxu0
    %v1265 = vadd.f32 0.0, %v1264
    %v1266 = vpop.f32.mrf.mxu0
    %1267 = vmatprep.mubr.f32.mxu0 0.0
    %1268 = vmatmul.mubr.f32.gmra.mxu0 %v570
    %v1269 = vpop.f32.mrf.mxu0
    %v1270 = vadd.f32 0.0, %v1269
    %v1271 = vpop.f32.mrf.mxu0
    %1272 = vmatprep.mubr.f32.mxu0 0.0
    %1273 = vmatmul.mubr.f32.gmra.mxu0 %v573
    %v1274 = vpop.f32.mrf.mxu0
    %v1275 = vadd.f32 0.0, %v1274
    %v1276 = vpop.f32.mrf.mxu0
    %1277 = vmatprep.mubr.f32.mxu0 0.0
    %1278 = vmatmul.mubr.f32.gmra.mxu0 %v576
    %v1279 = vpop.f32.mrf.mxu0
    %v1280 = vadd.f32 0.0, %v1279
    %v1281 = vpop.f32.mrf.mxu0
    %1282 = vdwg.mxu0
    %1284 = vset.pattern.permute.xlu0 0
    %1285 = vperm.xlu0 %1284, %v645
    %v1286 = vpop.permute.xlu0 %1285
    %1289 = vset.pattern.permute.xlu0 0
    %1290 = vperm.xlu0 %1289, %v650
    %v1291 = vpop.permute.xlu0 %1290
    %1294 = vset.pattern.permute.xlu0 0
    %1295 = vperm.xlu0 %1294, %v655
    %v1296 = vpop.permute.xlu0 %1295
    %1299 = vset.pattern.permute.xlu0 0
    %1300 = vperm.xlu0 %1299, %v660
    %v1301 = vpop.permute.xlu0 %1300
    %1304 = vset.pattern.permute.xlu0 0
    %1305 = vperm.xlu0 %1304, %v665
    %v1306 = vpop.permute.xlu0 %1305
    %1309 = vset.pattern.permute.xlu0 0
    %1310 = vperm.xlu0 %1309, %v670
    %v1311 = vpop.permute.xlu0 %1310
    %1314 = vset.pattern.permute.xlu0 0
    %1315 = vperm.xlu0 %1314, %v675
    %v1316 = vpop.permute.xlu0 %1315
    %1319 = vset.pattern.permute.xlu0 0
    %1320 = vperm.xlu0 %1319, %v680
    %v1321 = vpop.permute.xlu0 %1320
    %1324 = vset.pattern.permute.xlu0 0
    %1325 = vperm.xlu0 %1324, %v685
    %v1326 = vpop.permute.xlu0 %1325
    %1329 = vset.pattern.permute.xlu0 0
    %1330 = vperm.xlu0 %1329, %v690
    %v1331 = vpop.permute.xlu0 %1330
    %1334 = vset.pattern.permute.xlu0 0
    %1335 = vperm.xlu0 %1334, %v695
    %v1336 = vpop.permute.xlu0 %1335
    %1339 = vset.pattern.permute.xlu0 0
    %1340 = vperm.xlu0 %1339, %v700
    %v1341 = vpop.permute.xlu0 %1340
    %1344 = vset.pattern.permute.xlu0 0
    %1345 = vperm.xlu0 %1344, %v705
    %v1346 = vpop.permute.xlu0 %1345
    %1349 = vset.pattern.permute.xlu0 0
    %1350 = vperm.xlu0 %1349, %v710
    %v1351 = vpop.permute.xlu0 %1350
    %1354 = vset.pattern.permute.xlu0 0
    %1355 = vperm.xlu0 %1354, %v715
    %v1356 = vpop.permute.xlu0 %1355
    %1359 = vset.pattern.permute.xlu0 0
    %1360 = vperm.xlu0 %1359, %v720
    %v1361 = vpop.permute.xlu0 %1360
    %v1363 = vsel %vm49, %v1286, 0.0
    %v1364 = vsel %vm50, %v1291, 0.0
    %v1365 = vsel %vm51, %v1296, 0.0
    %v1366 = vsel %vm52, %v1301, 0.0
    %v1367 = vsel %vm53, %v1306, 0.0
    %v1368 = vsel %vm54, %v1311, 0.0
    %v1369 = vsel %vm55, %v1316, 0.0
    %v1370 = vsel %vm56, %v1321, 0.0
    %v1371 = vsel %vm57, %v1326, 0.0
    %v1372 = vsel %vm58, %v1331, 0.0
    %v1373 = vsel %vm59, %v1336, 0.0
    %v1374 = vsel %vm60, %v1341, 0.0
    %v1375 = vsel %vm61, %v1346, 0.0
    %v1376 = vsel %vm62, %v1351, 0.0
    %v1377 = vsel %vm63, %v1356, 0.0
    %v1378 = vsel %vm64, %v1361, 0.0
    %v1379 = vadd.f32 %v1363, %v1364
    %v1380 = vadd.f32 %v1379, %v1365
    %v1381 = vadd.f32 %v1380, %v1366
    %v1382 = vadd.f32 %v1381, %v1367
    %v1383 = vadd.f32 %v1382, %v1368
    %v1384 = vadd.f32 %v1383, %v1369
    %v1385 = vadd.f32 %v1384, %v1370
    %v1386 = vadd.f32 %v1385, %v1371
    %v1387 = vadd.f32 %v1386, %v1372
    %v1388 = vadd.f32 %v1387, %v1373
    %v1389 = vadd.f32 %v1388, %v1374
    %v1390 = vadd.f32 %v1389, %v1375
    %v1391 = vadd.f32 %v1390, %v1376
    %v1392 = vadd.f32 %v1391, %v1377
    %v1393 = vadd.f32 %v1392, %v1378
    %v1394 = vrot.slane %v1393, 4
    %v1395 = vadd.f32 %v1393, %v1394
    %v1396 = vrot.slane %v1395, 2
    %v1397 = vadd.f32 %v1395, %v1396
    %v1398 = vrot.slane %v1397, 1
    %v1399 = vadd.f32 %v1397, %v1398
    %v1400 = vstv %s25
    %v1401 = vadd.f32 %v1399, %v1400
    %v1402 = vld [vmem:[%s3] sm:$0x1]
    %v1403 = vld [vmem:[%s4] sm:$0x1]
    %v1404 = vmax.f32 %v1401, -6.0
    %v1405 = vmin.f32 %v1404, 6.0
    %vm1406 = vcmp.gt.f32.partialorder %v1402, 0.0
    %v1407 = vsel %vm1406, %v1405, -6.0
    %v1408 = vmax.f32 %v1401, 0.0
    %v1409 = vmul.f32 %v1401, %v1403
    %v1410 = vsub.f32 %v1408, %v1409
    %v1411 = vand.u32 2147483647, %v1401
    %v1412 = vsub.f32 0.0, %v1411
    %v1413 = vmul.f32 %v1412, 1.442695
    %v1414 = vpow.pop %v1413
    %v1415 = vadd.f32 %v1414, 1.0
    %v1416 = vlog2.pop %v1415
    %v1417 = vmul.f32 %v1416, 0.6931472
    %v1418 = vmul.f32 -0.5, %v1414
    %v1419 = vadd.f32 %v1418, 1.0
    %v1420 = vmul.f32 %v1419, %v1414
    %v1421 = vand.u32 2147483647, %v1414
    %vm1422 = vcmp.lt.f32.partialorder %v1421, 0.0004427343
    %v1423 = vsel %vm1422, %v1420, %v1417
    %v1424 = vadd.f32 %v1410, %v1423
    %v1425 = vsel %vm1406, %v1424, 0.0
    %1426 = vst [vmem:[#allocation3] sm:$0x1] %v1407
    %vm1427 = vcmask 1040384
    %v1428 = vsel %vm1427, %v1425, 0.0
    %1429 = vadd.xlane.f32.xlu0 %v1428
    %v1430 = vpop.xlane.xlu0 %1429
    %v1431 = vadd.f32 %v1430, 0.0
    %1433 = vset.pattern.permute.xlu0 0
    %1434 = vperm.xlu0 %1433, %v725
    %v1435 = vpop.permute.xlu0 %1434
    %1438 = vset.pattern.permute.xlu0 0
    %1439 = vperm.xlu0 %1438, %v730
    %v1440 = vpop.permute.xlu0 %1439
    %1443 = vset.pattern.permute.xlu0 0
    %1444 = vperm.xlu0 %1443, %v735
    %v1445 = vpop.permute.xlu0 %1444
    %1448 = vset.pattern.permute.xlu0 0
    %1449 = vperm.xlu0 %1448, %v740
    %v1450 = vpop.permute.xlu0 %1449
    %1453 = vset.pattern.permute.xlu0 0
    %1454 = vperm.xlu0 %1453, %v745
    %v1455 = vpop.permute.xlu0 %1454
    %1458 = vset.pattern.permute.xlu0 0
    %1459 = vperm.xlu0 %1458, %v750
    %v1460 = vpop.permute.xlu0 %1459
    %1463 = vset.pattern.permute.xlu0 0
    %1464 = vperm.xlu0 %1463, %v755
    %v1465 = vpop.permute.xlu0 %1464
    %1468 = vset.pattern.permute.xlu0 0
    %1469 = vperm.xlu0 %1468, %v760
    %v1470 = vpop.permute.xlu0 %1469
    %1473 = vset.pattern.permute.xlu0 0
    %1474 = vperm.xlu0 %1473, %v765
    %v1475 = vpop.permute.xlu0 %1474
    %1478 = vset.pattern.permute.xlu0 0
    %1479 = vperm.xlu0 %1478, %v770
    %v1480 = vpop.permute.xlu0 %1479
    %1483 = vset.pattern.permute.xlu0 0
    %1484 = vperm.xlu0 %1483, %v775
    %v1485 = vpop.permute.xlu0 %1484
    %1488 = vset.pattern.permute.xlu0 0
    %1489 = vperm.xlu0 %1488, %v780
    %v1490 = vpop.permute.xlu0 %1489
    %1493 = vset.pattern.permute.xlu0 0
    %1494 = vperm.xlu0 %1493, %v785
    %v1495 = vpop.permute.xlu0 %1494
    %1498 = vset.pattern.permute.xlu0 0
    %1499 = vperm.xlu0 %1498, %v790
    %v1500 = vpop.permute.xlu0 %1499
    %1503 = vset.pattern.permute.xlu0 0
    %1504 = vperm.xlu0 %1503, %v795
    %v1505 = vpop.permute.xlu0 %1504
    %1508 = vset.pattern.permute.xlu0 0
    %1509 = vperm.xlu0 %1508, %v800
    %v1510 = vpop.permute.xlu0 %1509
    %v1512 = vsel %vm49, %v1435, 0.0
    %v1513 = vsel %vm50, %v1440, 0.0
    %v1514 = vsel %vm51, %v1445, 0.0
    %v1515 = vsel %vm52, %v1450, 0.0
    %v1516 = vsel %vm53, %v1455, 0.0
    %v1517 = vsel %vm54, %v1460, 0.0
    %v1518 = vsel %vm55, %v1465, 0.0
    %v1519 = vsel %vm56, %v1470, 0.0
    %v1520 = vsel %vm57, %v1475, 0.0
    %v1521 = vsel %vm58, %v1480, 0.0
    %v1522 = vsel %vm59, %v1485, 0.0
    %v1523 = vsel %vm60, %v1490, 0.0
    %v1524 = vsel %vm61, %v1495, 0.0
    %v1525 = vsel %vm62, %v1500, 0.0
    %v1526 = vsel %vm63, %v1505, 0.0
    %v1527 = vsel %vm64, %v1510, 0.0
    %v1528 = vadd.f32 %v1512, %v1513
    %v1529 = vadd.f32 %v1528, %v1514
    %v1530 = vadd.f32 %v1529, %v1515
    %v1531 = vadd.f32 %v1530, %v1516
    %v1532 = vadd.f32 %v1531, %v1517
    %v1533 = vadd.f32 %v1532, %v1518
    %v1534 = vadd.f32 %v1533, %v1519
    %v1535 = vadd.f32 %v1534, %v1520
    %v1536 = vadd.f32 %v1535, %v1521
    %v1537 = vadd.f32 %v1536, %v1522
    %v1538 = vadd.f32 %v1537, %v1523
    %v1539 = vadd.f32 %v1538, %v1524
    %v1540 = vadd.f32 %v1539, %v1525
    %v1541 = vadd.f32 %v1540, %v1526
    %v1542 = vadd.f32 %v1541, %v1527
    %v1543 = vrot.slane %v1542, 4
    %v1544 = vadd.f32 %v1542, %v1543
    %v1545 = vrot.slane %v1544, 2
    %v1546 = vadd.f32 %v1544, %v1545
    %v1547 = vrot.slane %v1546, 1
    %v1548 = vadd.f32 %v1546, %v1547
    %v1549 = vadd.f32 %v1548, %v1400
    %v1550 = vld [vmem:[%s3 + $0x1] sm:$0x1]
    %v1551 = vld [vmem:[%s4 + $0x1] sm:$0x1]
    %v1552 = vmax.f32 %v1549, -6.0
    %v1553 = vmin.f32 %v1552, 6.0
    %vm1554 = vcmp.gt.f32.partialorder %v1550, 0.0
    %v1555 = vsel %vm1554, %v1553, -6.0
    %v1556 = vmax.f32 %v1549, 0.0
    %v1557 = vmul.f32 %v1549, %v1551
    %v1558 = vsub.f32 %v1556, %v1557
    %v1559 = vand.u32 2147483647, %v1549
    %v1560 = vsub.f32 0.0, %v1559
    %v1561 = vmul.f32 %v1560, 1.442695
    %v1562 = vpow.pop %v1561
    %v1563 = vadd.f32 %v1562, 1.0
    %v1564 = vlog2.pop %v1563
    %v1565 = vmul.f32 %v1564, 0.6931472
    %v1566 = vmul.f32 -0.5, %v1562
    %v1567 = vadd.f32 %v1566, 1.0
    %v1568 = vmul.f32 %v1567, %v1562
    %v1569 = vand.u32 2147483647, %v1562
    %vm1570 = vcmp.lt.f32.partialorder %v1569, 0.0004427343
    %v1571 = vsel %vm1570, %v1568, %v1565
    %v1572 = vadd.f32 %v1558, %v1571
    %v1573 = vsel %vm1554, %v1572, 0.0
    %1574 = vst [vmem:[#allocation3 + $0x1] sm:$0x1] %v1555
    %v1575 = vsel %vm1427, %v1573, 0.0
    %1576 = vadd.xlane.f32.xlu0 %v1575
    %v1577 = vpop.xlane.xlu0 %1576
    %v1578 = vadd.f32 %v1431, %v1577
    %1580 = vset.pattern.permute.xlu0 0
    %1581 = vperm.xlu0 %1580, %v805
    %v1582 = vpop.permute.xlu0 %1581
    %1585 = vset.pattern.permute.xlu0 0
    %1586 = vperm.xlu0 %1585, %v810
    %v1587 = vpop.permute.xlu0 %1586
    %1590 = vset.pattern.permute.xlu0 0
    %1591 = vperm.xlu0 %1590, %v815
    %v1592 = vpop.permute.xlu0 %1591
    %1595 = vset.pattern.permute.xlu0 0
    %1596 = vperm.xlu0 %1595, %v820
    %v1597 = vpop.permute.xlu0 %1596
    %1600 = vset.pattern.permute.xlu0 0
    %1601 = vperm.xlu0 %1600, %v825
    %v1602 = vpop.permute.xlu0 %1601
    %1605 = vset.pattern.permute.xlu0 0
    %1606 = vperm.xlu0 %1605, %v830
    %v1607 = vpop.permute.xlu0 %1606
    %1610 = vset.pattern.permute.xlu0 0
    %1611 = vperm.xlu0 %1610, %v835
    %v1612 = vpop.permute.xlu0 %1611
    %1615 = vset.pattern.permute.xlu0 0
    %1616 = vperm.xlu0 %1615, %v840
    %v1617 = vpop.permute.xlu0 %1616
    %1620 = vset.pattern.permute.xlu0 0
    %1621 = vperm.xlu0 %1620, %v845
    %v1622 = vpop.permute.xlu0 %1621
    %1625 = vset.pattern.permute.xlu0 0
    %1626 = vperm.xlu0 %1625, %v850
    %v1627 = vpop.permute.xlu0 %1626
    %1630 = vset.pattern.permute.xlu0 0
    %1631 = vperm.xlu0 %1630, %v855
    %v1632 = vpop.permute.xlu0 %1631
    %1635 = vset.pattern.permute.xlu0 0
    %1636 = vperm.xlu0 %1635, %v860
    %v1637 = vpop.permute.xlu0 %1636
    %1640 = vset.pattern.permute.xlu0 0
    %1641 = vperm.xlu0 %1640, %v865
    %v1642 = vpop.permute.xlu0 %1641
    %1645 = vset.pattern.permute.xlu0 0
    %1646 = vperm.xlu0 %1645, %v870
    %v1647 = vpop.permute.xlu0 %1646
    %1650 = vset.pattern.permute.xlu0 0
    %1651 = vperm.xlu0 %1650, %v875
    %v1652 = vpop.permute.xlu0 %1651
    %1655 = vset.pattern.permute.xlu0 0
    %1656 = vperm.xlu0 %1655, %v880
    %v1657 = vpop.permute.xlu0 %1656
    %v1659 = vsel %vm49, %v1582, 0.0
    %v1660 = vsel %vm50, %v1587, 0.0
    %v1661 = vsel %vm51, %v1592, 0.0
    %v1662 = vsel %vm52, %v1597, 0.0
    %v1663 = vsel %vm53, %v1602, 0.0
    %v1664 = vsel %vm54, %v1607, 0.0
    %v1665 = vsel %vm55, %v1612, 0.0
    %v1666 = vsel %vm56, %v1617, 0.0
    %v1667 = vsel %vm57, %v1622, 0.0
    %v1668 = vsel %vm58, %v1627, 0.0
    %v1669 = vsel %vm59, %v1632, 0.0
    %v1670 = vsel %vm60, %v1637, 0.0
    %v1671 = vsel %vm61, %v1642, 0.0
    %v1672 = vsel %vm62, %v1647, 0.0
    %v1673 = vsel %vm63, %v1652, 0.0
    %v1674 = vsel %vm64, %v1657, 0.0
    %v1675 = vadd.f32 %v1659, %v1660
    %v1676 = vadd.f32 %v1675, %v1661
    %v1677 = vadd.f32 %v1676, %v1662
    %v1678 = vadd.f32 %v1677, %v1663
    %v1679 = vadd.f32 %v1678, %v1664
    %v1680 = vadd.f32 %v1679, %v1665
    %v1681 = vadd.f32 %v1680, %v1666
    %v1682 = vadd.f32 %v1681, %v1667
    %v1683 = vadd.f32 %v1682, %v1668
    %v1684 = vadd.f32 %v1683, %v1669
    %v1685 = vadd.f32 %v1684, %v1670
    %v1686 = vadd.f32 %v1685, %v1671
    %v1687 = vadd.f32 %v1686, %v1672
    %v1688 = vadd.f32 %v1687, %v1673
    %v1689 = vadd.f32 %v1688, %v1674
    %v1690 = vrot.slane %v1689, 4
    %v1691 = vadd.f32 %v1689, %v1690
    %v1692 = vrot.slane %v1691, 2
    %v1693 = vadd.f32 %v1691, %v1692
    %v1694 = vrot.slane %v1693, 1
    %v1695 = vadd.f32 %v1693, %v1694
    %v1696 = vadd.f32 %v1695, %v1400
    %v1697 = vld [vmem:[%s3 + $0x2] sm:$0x1]
    %v1698 = vld [vmem:[%s4 + $0x2] sm:$0x1]
    %v1699 = vmax.f32 %v1696, -6.0
    %v1700 = vmin.f32 %v1699, 6.0
    %vm1701 = vcmp.gt.f32.partialorder %v1697, 0.0
    %v1702 = vsel %vm1701, %v1700, -6.0
    %v1703 = vmax.f32 %v1696, 0.0
    %v1704 = vmul.f32 %v1696, %v1698
    %v1705 = vsub.f32 %v1703, %v1704
    %v1706 = vand.u32 2147483647, %v1696
    %v1707 = vsub.f32 0.0, %v1706
    %v1708 = vmul.f32 %v1707, 1.442695
    %v1709 = vpow.pop %v1708
    %v1710 = vadd.f32 %v1709, 1.0
    %v1711 = vlog2.pop %v1710
    %v1712 = vmul.f32 %v1711, 0.6931472
    %v1713 = vmul.f32 -0.5, %v1709
    %v1714 = vadd.f32 %v1713, 1.0
    %v1715 = vmul.f32 %v1714, %v1709
    %v1716 = vand.u32 2147483647, %v1709
    %vm1717 = vcmp.lt.f32.partialorder %v1716, 0.0004427343
    %v1718 = vsel %vm1717, %v1715, %v1712
    %v1719 = vadd.f32 %v1705, %v1718
    %v1720 = vsel %vm1701, %v1719, 0.0
    %1721 = vst [vmem:[#allocation3 + $0x2] sm:$0x1] %v1702
    %v1722 = vsel %vm1427, %v1720, 0.0
    %1723 = vadd.xlane.f32.xlu0 %v1722
    %v1724 = vpop.xlane.xlu0 %1723
    %v1725 = vadd.f32 %v1578, %v1724
    %1727 = vset.pattern.permute.xlu0 0
    %1728 = vperm.xlu0 %1727, %v885
    %v1729 = vpop.permute.xlu0 %1728
    %1732 = vset.pattern.permute.xlu0 0
    %1733 = vperm.xlu0 %1732, %v890
    %v1734 = vpop.permute.xlu0 %1733
    %1737 = vset.pattern.permute.xlu0 0
    %1738 = vperm.xlu0 %1737, %v895
    %v1739 = vpop.permute.xlu0 %1738
    %1742 = vset.pattern.permute.xlu0 0
    %1743 = vperm.xlu0 %1742, %v900
    %v1744 = vpop.permute.xlu0 %1743
    %1747 = vset.pattern.permute.xlu0 0
    %1748 = vperm.xlu0 %1747, %v905
    %v1749 = vpop.permute.xlu0 %1748
    %1752 = vset.pattern.permute.xlu0 0
    %1753 = vperm.xlu0 %1752, %v910
    %v1754 = vpop.permute.xlu0 %1753
    %1757 = vset.pattern.permute.xlu0 0
    %1758 = vperm.xlu0 %1757, %v915
    %v1759 = vpop.permute.xlu0 %1758
    %1762 = vset.pattern.permute.xlu0 0
    %1763 = vperm.xlu0 %1762, %v920
    %v1764 = vpop.permute.xlu0 %1763
    %1767 = vset.pattern.permute.xlu0 0
    %1768 = vperm.xlu0 %1767, %v925
    %v1769 = vpop.permute.xlu0 %1768
    %1772 = vset.pattern.permute.xlu0 0
    %1773 = vperm.xlu0 %1772, %v930
    %v1774 = vpop.permute.xlu0 %1773
    %1777 = vset.pattern.permute.xlu0 0
    %1778 = vperm.xlu0 %1777, %v935
    %v1779 = vpop.permute.xlu0 %1778
    %1782 = vset.pattern.permute.xlu0 0
    %1783 = vperm.xlu0 %1782, %v940
    %v1784 = vpop.permute.xlu0 %1783
    %1787 = vset.pattern.permute.xlu0 0
    %1788 = vperm.xlu0 %1787, %v945
    %v1789 = vpop.permute.xlu0 %1788
    %1792 = vset.pattern.permute.xlu0 0
    %1793 = vperm.xlu0 %1792, %v950
    %v1794 = vpop.permute.xlu0 %1793
    %1797 = vset.pattern.permute.xlu0 0
    %1798 = vperm.xlu0 %1797, %v955
    %v1799 = vpop.permute.xlu0 %1798
    %1802 = vset.pattern.permute.xlu0 0
    %1803 = vperm.xlu0 %1802, %v960
    %v1804 = vpop.permute.xlu0 %1803
    %v1806 = vsel %vm49, %v1729, 0.0
    %v1807 = vsel %vm50, %v1734, 0.0
    %v1808 = vsel %vm51, %v1739, 0.0
    %v1809 = vsel %vm52, %v1744, 0.0
    %v1810 = vsel %vm53, %v1749, 0.0
    %v1811 = vsel %vm54, %v1754, 0.0
    %v1812 = vsel %vm55, %v1759, 0.0
    %v1813 = vsel %vm56, %v1764, 0.0
    %v1814 = vsel %vm57, %v1769, 0.0
    %v1815 = vsel %vm58, %v1774, 0.0
    %v1816 = vsel %vm59, %v1779, 0.0
    %v1817 = vsel %vm60, %v1784, 0.0
    %v1818 = vsel %vm61, %v1789, 0.0
    %v1819 = vsel %vm62, %v1794, 0.0
    %v1820 = vsel %vm63, %v1799, 0.0
    %v1821 = vsel %vm64, %v1804, 0.0
    %v1822 = vadd.f32 %v1806, %v1807
    %v1823 = vadd.f32 %v1822, %v1808
    %v1824 = vadd.f32 %v1823, %v1809
    %v1825 = vadd.f32 %v1824, %v1810
    %v1826 = vadd.f32 %v1825, %v1811
    %v1827 = vadd.f32 %v1826, %v1812
    %v1828 = vadd.f32 %v1827, %v1813
    %v1829 = vadd.f32 %v1828, %v1814
    %v1830 = vadd.f32 %v1829, %v1815
    %v1831 = vadd.f32 %v1830, %v1816
    %v1832 = vadd.f32 %v1831, %v1817
    %v1833 = vadd.f32 %v1832, %v1818
    %v1834 = vadd.f32 %v1833, %v1819
    %v1835 = vadd.f32 %v1834, %v1820
    %v1836 = vadd.f32 %v1835, %v1821
    %v1837 = vrot.slane %v1836, 4
    %v1838 = vadd.f32 %v1836, %v1837
    %v1839 = vrot.slane %v1838, 2
    %v1840 = vadd.f32 %v1838, %v1839
    %v1841 = vrot.slane %v1840, 1
    %v1842 = vadd.f32 %v1840, %v1841
    %v1843 = vadd.f32 %v1842, %v1400
    %v1844 = vld [vmem:[%s3 + $0x3] sm:$0x1]
    %v1845 = vld [vmem:[%s4 + $0x3] sm:$0x1]
    %v1846 = vmax.f32 %v1843, -6.0
    %v1847 = vmin.f32 %v1846, 6.0
    %vm1848 = vcmp.gt.f32.partialorder %v1844, 0.0
    %v1849 = vsel %vm1848, %v1847, -6.0
    %v1850 = vmax.f32 %v1843, 0.0
    %v1851 = vmul.f32 %v1843, %v1845
    %v1852 = vsub.f32 %v1850, %v1851
    %v1853 = vand.u32 2147483647, %v1843
    %v1854 = vsub.f32 0.0, %v1853
    %v1855 = vmul.f32 %v1854, 1.442695
    %v1856 = vpow.pop %v1855
    %v1857 = vadd.f32 %v1856, 1.0
    %v1858 = vlog2.pop %v1857
    %v1859 = vmul.f32 %v1858, 0.6931472
    %v1860 = vmul.f32 -0.5, %v1856
    %v1861 = vadd.f32 %v1860, 1.0
    %v1862 = vmul.f32 %v1861, %v1856
    %v1863 = vand.u32 2147483647, %v1856
    %vm1864 = vcmp.lt.f32.partialorder %v1863, 0.0004427343
    %v1865 = vsel %vm1864, %v1862, %v1859
    %v1866 = vadd.f32 %v1852, %v1865
    %v1867 = vsel %vm1848, %v1866, 0.0
    %1868 = vst [vmem:[#allocation3 + $0x3] sm:$0x1] %v1849
    %v1869 = vsel %vm1427, %v1867, 0.0
    %1870 = vadd.xlane.f32.xlu0 %v1869
    %v1871 = vpop.xlane.xlu0 %1870
    %v1872 = vadd.f32 %v1725, %v1871
    %1874 = vset.pattern.permute.xlu0 0
    %1875 = vperm.xlu0 %1874, %v965
    %v1876 = vpop.permute.xlu0 %1875
    %1879 = vset.pattern.permute.xlu0 0
    %1880 = vperm.xlu0 %1879, %v970
    %v1881 = vpop.permute.xlu0 %1880
    %1884 = vset.pattern.permute.xlu0 0
    %1885 = vperm.xlu0 %1884, %v975
    %v1886 = vpop.permute.xlu0 %1885
    %1889 = vset.pattern.permute.xlu0 0
    %1890 = vperm.xlu0 %1889, %v980
    %v1891 = vpop.permute.xlu0 %1890
    %1894 = vset.pattern.permute.xlu0 0
    %1895 = vperm.xlu0 %1894, %v985
    %v1896 = vpop.permute.xlu0 %1895
    %1899 = vset.pattern.permute.xlu0 0
    %1900 = vperm.xlu0 %1899, %v990
    %v1901 = vpop.permute.xlu0 %1900
    %1904 = vset.pattern.permute.xlu0 0
    %1905 = vperm.xlu0 %1904, %v995
    %v1906 = vpop.permute.xlu0 %1905
    %1909 = vset.pattern.permute.xlu0 0
    %1910 = vperm.xlu0 %1909, %v1000
    %v1911 = vpop.permute.xlu0 %1910
    %1914 = vset.pattern.permute.xlu0 0
    %1915 = vperm.xlu0 %1914, %v1005
    %v1916 = vpop.permute.xlu0 %1915
    %1919 = vset.pattern.permute.xlu0 0
    %1920 = vperm.xlu0 %1919, %v1010
    %v1921 = vpop.permute.xlu0 %1920
    %1924 = vset.pattern.permute.xlu0 0
    %1925 = vperm.xlu0 %1924, %v1015
    %v1926 = vpop.permute.xlu0 %1925
    %1929 = vset.pattern.permute.xlu0 0
    %1930 = vperm.xlu0 %1929, %v1020
    %v1931 = vpop.permute.xlu0 %1930
    %1934 = vset.pattern.permute.xlu0 0
    %1935 = vperm.xlu0 %1934, %v1025
    %v1936 = vpop.permute.xlu0 %1935
    %1939 = vset.pattern.permute.xlu0 0
    %1940 = vperm.xlu0 %1939, %v1030
    %v1941 = vpop.permute.xlu0 %1940
    %1944 = vset.pattern.permute.xlu0 0
    %1945 = vperm.xlu0 %1944, %v1035
    %v1946 = vpop.permute.xlu0 %1945
    %1949 = vset.pattern.permute.xlu0 0
    %1950 = vperm.xlu0 %1949, %v1040
    %v1951 = vpop.permute.xlu0 %1950
    %v1953 = vsel %vm49, %v1876, 0.0
    %v1954 = vsel %vm50, %v1881, 0.0
    %v1955 = vsel %vm51, %v1886, 0.0
    %v1956 = vsel %vm52, %v1891, 0.0
    %v1957 = vsel %vm53, %v1896, 0.0
    %v1958 = vsel %vm54, %v1901, 0.0
    %v1959 = vsel %vm55, %v1906, 0.0
    %v1960 = vsel %vm56, %v1911, 0.0
    %v1961 = vsel %vm57, %v1916, 0.0
    %v1962 = vsel %vm58, %v1921, 0.0
    %v1963 = vsel %vm59, %v1926, 0.0
    %v1964 = vsel %vm60, %v1931, 0.0
    %v1965 = vsel %vm61, %v1936, 0.0
    %v1966 = vsel %vm62, %v1941, 0.0
    %v1967 = vsel %vm63, %v1946, 0.0
    %v1968 = vsel %vm64, %v1951, 0.0
    %v1969 = vadd.f32 %v1953, %v1954
    %v1970 = vadd.f32 %v1969, %v1955
    %v1971 = vadd.f32 %v1970, %v1956
    %v1972 = vadd.f32 %v1971, %v1957
    %v1973 = vadd.f32 %v1972, %v1958
    %v1974 = vadd.f32 %v1973, %v1959
    %v1975 = vadd.f32 %v1974, %v1960
    %v1976 = vadd.f32 %v1975, %v1961
    %v1977 = vadd.f32 %v1976, %v1962
    %v1978 = vadd.f32 %v1977, %v1963
    %v1979 = vadd.f32 %v1978, %v1964
    %v1980 = vadd.f32 %v1979, %v1965
    %v1981 = vadd.f32 %v1980, %v1966
    %v1982 = vadd.f32 %v1981, %v1967
    %v1983 = vadd.f32 %v1982, %v1968
    %v1984 = vrot.slane %v1983, 4
    %v1985 = vadd.f32 %v1983, %v1984
    %v1986 = vrot.slane %v1985, 2
    %v1987 = vadd.f32 %v1985, %v1986
    %v1988 = vrot.slane %v1987, 1
    %v1989 = vadd.f32 %v1987, %v1988
    %v1990 = vadd.f32 %v1989, %v1400
    %v1991 = vld [vmem:[%s3 + $0x4] sm:$0x1]
    %v1992 = vld [vmem:[%s4 + $0x4] sm:$0x1]
    %v1993 = vmax.f32 %v1990, -6.0
    %v1994 = vmin.f32 %v1993, 6.0
    %vm1995 = vcmp.gt.f32.partialorder %v1991, 0.0
    %v1996 = vsel %vm1995, %v1994, -6.0
    %v1997 = vmax.f32 %v1990, 0.0
    %v1998 = vmul.f32 %v1990, %v1992
    %v1999 = vsub.f32 %v1997, %v1998
    %v2000 = vand.u32 2147483647, %v1990
    %v2001 = vsub.f32 0.0, %v2000
    %v2002 = vmul.f32 %v2001, 1.442695
    %v2003 = vpow.pop %v2002
    %v2004 = vadd.f32 %v2003, 1.0
    %v2005 = vlog2.pop %v2004
    %v2006 = vmul.f32 %v2005, 0.6931472
    %v2007 = vmul.f32 -0.5, %v2003
    %v2008 = vadd.f32 %v2007, 1.0
    %v2009 = vmul.f32 %v2008, %v2003
    %v2010 = vand.u32 2147483647, %v2003
    %vm2011 = vcmp.lt.f32.partialorder %v2010, 0.0004427343
    %v2012 = vsel %vm2011, %v2009, %v2006
    %v2013 = vadd.f32 %v1999, %v2012
    %v2014 = vsel %vm1995, %v2013, 0.0
    %2015 = vst [vmem:[#allocation3 + $0x4] sm:$0x1] %v1996
    %v2016 = vsel %vm1427, %v2014, 0.0
    %2017 = vadd.xlane.f32.xlu0 %v2016
    %v2018 = vpop.xlane.xlu0 %2017
    %v2019 = vadd.f32 %v1872, %v2018
    %2021 = vset.pattern.permute.xlu0 0
    %2022 = vperm.xlu0 %2021, %v1045
    %v2023 = vpop.permute.xlu0 %2022
    %2026 = vset.pattern.permute.xlu0 0
    %2027 = vperm.xlu0 %2026, %v1050
    %v2028 = vpop.permute.xlu0 %2027
    %2031 = vset.pattern.permute.xlu0 0
    %2032 = vperm.xlu0 %2031, %v1055
    %v2033 = vpop.permute.xlu0 %2032
    %2036 = vset.pattern.permute.xlu0 0
    %2037 = vperm.xlu0 %2036, %v1060
    %v2038 = vpop.permute.xlu0 %2037
    %2041 = vset.pattern.permute.xlu0 0
    %2042 = vperm.xlu0 %2041, %v1065
    %v2043 = vpop.permute.xlu0 %2042
    %2046 = vset.pattern.permute.xlu0 0
    %2047 = vperm.xlu0 %2046, %v1070
    %v2048 = vpop.permute.xlu0 %2047
    %2051 = vset.pattern.permute.xlu0 0
    %2052 = vperm.xlu0 %2051, %v1075
    %v2053 = vpop.permute.xlu0 %2052
    %2056 = vset.pattern.permute.xlu0 0
    %2057 = vperm.xlu0 %2056, %v1080
    %v2058 = vpop.permute.xlu0 %2057
    %2061 = vset.pattern.permute.xlu0 0
    %2062 = vperm.xlu0 %2061, %v1085
    %v2063 = vpop.permute.xlu0 %2062
    %2066 = vset.pattern.permute.xlu0 0
    %2067 = vperm.xlu0 %2066, %v1090
    %v2068 = vpop.permute.xlu0 %2067
    %2071 = vset.pattern.permute.xlu0 0
    %2072 = vperm.xlu0 %2071, %v1095
    %v2073 = vpop.permute.xlu0 %2072
    %2076 = vset.pattern.permute.xlu0 0
    %2077 = vperm.xlu0 %2076, %v1100
    %v2078 = vpop.permute.xlu0 %2077
    %2081 = vset.pattern.permute.xlu0 0
    %2082 = vperm.xlu0 %2081, %v1105
    %v2083 = vpop.permute.xlu0 %2082
    %2086 = vset.pattern.permute.xlu0 0
    %2087 = vperm.xlu0 %2086, %v1110
    %v2088 = vpop.permute.xlu0 %2087
    %2091 = vset.pattern.permute.xlu0 0
    %2092 = vperm.xlu0 %2091, %v1115
    %v2093 = vpop.permute.xlu0 %2092
    %2096 = vset.pattern.permute.xlu0 0
    %2097 = vperm.xlu0 %2096, %v1120
    %v2098 = vpop.permute.xlu0 %2097
    %v2100 = vsel %vm49, %v2023, 0.0
    %v2101 = vsel %vm50, %v2028, 0.0
    %v2102 = vsel %vm51, %v2033, 0.0
    %v2103 = vsel %vm52, %v2038, 0.0
    %v2104 = vsel %vm53, %v2043, 0.0
    %v2105 = vsel %vm54, %v2048, 0.0
    %v2106 = vsel %vm55, %v2053, 0.0
    %v2107 = vsel %vm56, %v2058, 0.0
    %v2108 = vsel %vm57, %v2063, 0.0
    %v2109 = vsel %vm58, %v2068, 0.0
    %v2110 = vsel %vm59, %v2073, 0.0
    %v2111 = vsel %vm60, %v2078, 0.0
    %v2112 = vsel %vm61, %v2083, 0.0
    %v2113 = vsel %vm62, %v2088, 0.0
    %v2114 = vsel %vm63, %v2093, 0.0
    %v2115 = vsel %vm64, %v2098, 0.0
    %v2116 = vadd.f32 %v2100, %v2101
    %v2117 = vadd.f32 %v2116, %v2102
    %v2118 = vadd.f32 %v2117, %v2103
    %v2119 = vadd.f32 %v2118, %v2104
    %v2120 = vadd.f32 %v2119, %v2105
    %v2121 = vadd.f32 %v2120, %v2106
    %v2122 = vadd.f32 %v2121, %v2107
    %v2123 = vadd.f32 %v2122, %v2108
    %v2124 = vadd.f32 %v2123, %v2109
    %v2125 = vadd.f32 %v2124, %v2110
    %v2126 = vadd.f32 %v2125, %v2111
    %v2127 = vadd.f32 %v2126, %v2112
    %v2128 = vadd.f32 %v2127, %v2113
    %v2129 = vadd.f32 %v2128, %v2114
    %v2130 = vadd.f32 %v2129, %v2115
    %v2131 = vrot.slane %v2130, 4
    %v2132 = vadd.f32 %v2130, %v2131
    %v2133 = vrot.slane %v2132, 2
    %v2134 = vadd.f32 %v2132, %v2133
    %v2135 = vrot.slane %v2134, 1
    %v2136 = vadd.f32 %v2134, %v2135
    %v2137 = vadd.f32 %v2136, %v1400
    %v2138 = vld [vmem:[%s3 + $0x5] sm:$0x1]
    %v2139 = vld [vmem:[%s4 + $0x5] sm:$0x1]
    %v2140 = vmax.f32 %v2137, -6.0
    %v2141 = vmin.f32 %v2140, 6.0
    %vm2142 = vcmp.gt.f32.partialorder %v2138, 0.0
    %v2143 = vsel %vm2142, %v2141, -6.0
    %v2144 = vmax.f32 %v2137, 0.0
    %v2145 = vmul.f32 %v2137, %v2139
    %v2146 = vsub.f32 %v2144, %v2145
    %v2147 = vand.u32 2147483647, %v2137
    %v2148 = vsub.f32 0.0, %v2147
    %v2149 = vmul.f32 %v2148, 1.442695
    %v2150 = vpow.pop %v2149
    %v2151 = vadd.f32 %v2150, 1.0
    %v2152 = vlog2.pop %v2151
    %v2153 = vmul.f32 %v2152, 0.6931472
    %v2154 = vmul.f32 -0.5, %v2150
    %v2155 = vadd.f32 %v2154, 1.0
    %v2156 = vmul.f32 %v2155, %v2150
    %v2157 = vand.u32 2147483647, %v2150
    %vm2158 = vcmp.lt.f32.partialorder %v2157, 0.0004427343
    %v2159 = vsel %vm2158, %v2156, %v2153
    %v2160 = vadd.f32 %v2146, %v2159
    %v2161 = vsel %vm2142, %v2160, 0.0
    %2162 = vst [vmem:[#allocation3 + $0x5] sm:$0x1] %v2143
    %v2163 = vsel %vm1427, %v2161, 0.0
    %2164 = vadd.xlane.f32.xlu0 %v2163
    %v2165 = vpop.xlane.xlu0 %2164
    %v2166 = vadd.f32 %v2019, %v2165
    %2168 = vset.pattern.permute.xlu0 0
    %2169 = vperm.xlu0 %2168, %v1125
    %v2170 = vpop.permute.xlu0 %2169
    %2173 = vset.pattern.permute.xlu0 0
    %2174 = vperm.xlu0 %2173, %v1130
    %v2175 = vpop.permute.xlu0 %2174
    %2178 = vset.pattern.permute.xlu0 0
    %2179 = vperm.xlu0 %2178, %v1135
    %v2180 = vpop.permute.xlu0 %2179
    %2183 = vset.pattern.permute.xlu0 0
    %2184 = vperm.xlu0 %2183, %v1140
    %v2185 = vpop.permute.xlu0 %2184
    %2188 = vset.pattern.permute.xlu0 0
    %2189 = vperm.xlu0 %2188, %v1145
    %v2190 = vpop.permute.xlu0 %2189
    %2193 = vset.pattern.permute.xlu0 0
    %2194 = vperm.xlu0 %2193, %v1150
    %v2195 = vpop.permute.xlu0 %2194
    %2198 = vset.pattern.permute.xlu0 0
    %2199 = vperm.xlu0 %2198, %v1155
    %v2200 = vpop.permute.xlu0 %2199
    %2203 = vset.pattern.permute.xlu0 0
    %2204 = vperm.xlu0 %2203, %v1160
    %v2205 = vpop.permute.xlu0 %2204
    %2208 = vset.pattern.permute.xlu0 0
    %2209 = vperm.xlu0 %2208, %v1165
    %v2210 = vpop.permute.xlu0 %2209
    %2213 = vset.pattern.permute.xlu0 0
    %2214 = vperm.xlu0 %2213, %v1170
    %v2215 = vpop.permute.xlu0 %2214
    %2218 = vset.pattern.permute.xlu0 0
    %2219 = vperm.xlu0 %2218, %v1175
    %v2220 = vpop.permute.xlu0 %2219
    %2223 = vset.pattern.permute.xlu0 0
    %2224 = vperm.xlu0 %2223, %v1180
    %v2225 = vpop.permute.xlu0 %2224
    %2228 = vset.pattern.permute.xlu0 0
    %2229 = vperm.xlu0 %2228, %v1185
    %v2230 = vpop.permute.xlu0 %2229
    %2233 = vset.pattern.permute.xlu0 0
    %2234 = vperm.xlu0 %2233, %v1190
    %v2235 = vpop.permute.xlu0 %2234
    %2238 = vset.pattern.permute.xlu0 0
    %2239 = vperm.xlu0 %2238, %v1195
    %v2240 = vpop.permute.xlu0 %2239
    %2243 = vset.pattern.permute.xlu0 0
    %2244 = vperm.xlu0 %2243, %v1200
    %v2245 = vpop.permute.xlu0 %2244
    %v2247 = vsel %vm49, %v2170, 0.0
    %v2248 = vsel %vm50, %v2175, 0.0
    %v2249 = vsel %vm51, %v2180, 0.0
    %v2250 = vsel %vm52, %v2185, 0.0
    %v2251 = vsel %vm53, %v2190, 0.0
    %v2252 = vsel %vm54, %v2195, 0.0
    %v2253 = vsel %vm55, %v2200, 0.0
    %v2254 = vsel %vm56, %v2205, 0.0
    %v2255 = vsel %vm57, %v2210, 0.0
    %v2256 = vsel %vm58, %v2215, 0.0
    %v2257 = vsel %vm59, %v2220, 0.0
    %v2258 = vsel %vm60, %v2225, 0.0
    %v2259 = vsel %vm61, %v2230, 0.0
    %v2260 = vsel %vm62, %v2235, 0.0
    %v2261 = vsel %vm63, %v2240, 0.0
    %v2262 = vsel %vm64, %v2245, 0.0
    %v2263 = vadd.f32 %v2247, %v2248
    %v2264 = vadd.f32 %v2263, %v2249
    %v2265 = vadd.f32 %v2264, %v2250
    %v2266 = vadd.f32 %v2265, %v2251
    %v2267 = vadd.f32 %v2266, %v2252
    %v2268 = vadd.f32 %v2267, %v2253
    %v2269 = vadd.f32 %v2268, %v2254
    %v2270 = vadd.f32 %v2269, %v2255
    %v2271 = vadd.f32 %v2270, %v2256
    %v2272 = vadd.f32 %v2271, %v2257
    %v2273 = vadd.f32 %v2272, %v2258
    %v2274 = vadd.f32 %v2273, %v2259
    %v2275 = vadd.f32 %v2274, %v2260
    %v2276 = vadd.f32 %v2275, %v2261
    %v2277 = vadd.f32 %v2276, %v2262
    %v2278 = vrot.slane %v2277, 4
    %v2279 = vadd.f32 %v2277, %v2278
    %v2280 = vrot.slane %v2279, 2
    %v2281 = vadd.f32 %v2279, %v2280
    %v2282 = vrot.slane %v2281, 1
    %v2283 = vadd.f32 %v2281, %v2282
    %v2284 = vadd.f32 %v2283, %v1400
    %v2285 = vld [vmem:[%s3 + $0x6] sm:$0x1]
    %v2286 = vld [vmem:[%s4 + $0x6] sm:$0x1]
    %v2287 = vmax.f32 %v2284, -6.0
    %v2288 = vmin.f32 %v2287, 6.0
    %vm2289 = vcmp.gt.f32.partialorder %v2285, 0.0
    %v2290 = vsel %vm2289, %v2288, -6.0
    %v2291 = vmax.f32 %v2284, 0.0
    %v2292 = vmul.f32 %v2284, %v2286
    %v2293 = vsub.f32 %v2291, %v2292
    %v2294 = vand.u32 2147483647, %v2284
    %v2295 = vsub.f32 0.0, %v2294
    %v2296 = vmul.f32 %v2295, 1.442695
    %v2297 = vpow.pop %v2296
    %v2298 = vadd.f32 %v2297, 1.0
    %v2299 = vlog2.pop %v2298
    %v2300 = vmul.f32 %v2299, 0.6931472
    %v2301 = vmul.f32 -0.5, %v2297
    %v2302 = vadd.f32 %v2301, 1.0
    %v2303 = vmul.f32 %v2302, %v2297
    %v2304 = vand.u32 2147483647, %v2297
    %vm2305 = vcmp.lt.f32.partialorder %v2304, 0.0004427343
    %v2306 = vsel %vm2305, %v2303, %v2300
    %v2307 = vadd.f32 %v2293, %v2306
    %v2308 = vsel %vm2289, %v2307, 0.0
    %2309 = vst [vmem:[#allocation3 + $0x6] sm:$0x1] %v2290
    %v2310 = vsel %vm1427, %v2308, 0.0
    %2311 = vadd.xlane.f32.xlu0 %v2310
    %v2312 = vpop.xlane.xlu0 %2311
    %v2313 = vadd.f32 %v2166, %v2312
    %2315 = vset.pattern.permute.xlu0 0
    %2316 = vperm.xlu0 %2315, %v1205
    %v2317 = vpop.permute.xlu0 %2316
    %2320 = vset.pattern.permute.xlu0 0
    %2321 = vperm.xlu0 %2320, %v1210
    %v2322 = vpop.permute.xlu0 %2321
    %2325 = vset.pattern.permute.xlu0 0
    %2326 = vperm.xlu0 %2325, %v1215
    %v2327 = vpop.permute.xlu0 %2326
    %2330 = vset.pattern.permute.xlu0 0
    %2331 = vperm.xlu0 %2330, %v1220
    %v2332 = vpop.permute.xlu0 %2331
    %2335 = vset.pattern.permute.xlu0 0
    %2336 = vperm.xlu0 %2335, %v1225
    %v2337 = vpop.permute.xlu0 %2336
    %2340 = vset.pattern.permute.xlu0 0
    %2341 = vperm.xlu0 %2340, %v1230
    %v2342 = vpop.permute.xlu0 %2341
    %2345 = vset.pattern.permute.xlu0 0
    %2346 = vperm.xlu0 %2345, %v1235
    %v2347 = vpop.permute.xlu0 %2346
    %2350 = vset.pattern.permute.xlu0 0
    %2351 = vperm.xlu0 %2350, %v1240
    %v2352 = vpop.permute.xlu0 %2351
    %2355 = vset.pattern.permute.xlu0 0
    %2356 = vperm.xlu0 %2355, %v1245
    %v2357 = vpop.permute.xlu0 %2356
    %2360 = vset.pattern.permute.xlu0 0
    %2361 = vperm.xlu0 %2360, %v1250
    %v2362 = vpop.permute.xlu0 %2361
    %2365 = vset.pattern.permute.xlu0 0
    %2366 = vperm.xlu0 %2365, %v1255
    %v2367 = vpop.permute.xlu0 %2366
    %2370 = vset.pattern.permute.xlu0 0
    %2371 = vperm.xlu0 %2370, %v1260
    %v2372 = vpop.permute.xlu0 %2371
    %2375 = vset.pattern.permute.xlu0 0
    %2376 = vperm.xlu0 %2375, %v1265
    %v2377 = vpop.permute.xlu0 %2376
    %2380 = vset.pattern.permute.xlu0 0
    %2381 = vperm.xlu0 %2380, %v1270
    %v2382 = vpop.permute.xlu0 %2381
    %2385 = vset.pattern.permute.xlu0 0
    %2386 = vperm.xlu0 %2385, %v1275
    %v2387 = vpop.permute.xlu0 %2386
    %2390 = vset.pattern.permute.xlu0 0
    %2391 = vperm.xlu0 %2390, %v1280
    %v2392 = vpop.permute.xlu0 %2391
    %v2394 = vsel %vm49, %v2317, 0.0
    %v2395 = vsel %vm50, %v2322, 0.0
    %v2396 = vsel %vm51, %v2327, 0.0
    %v2397 = vsel %vm52, %v2332, 0.0
    %v2398 = vsel %vm53, %v2337, 0.0
    %v2399 = vsel %vm54, %v2342, 0.0
    %v2400 = vsel %vm55, %v2347, 0.0
    %v2401 = vsel %vm56, %v2352, 0.0
    %v2402 = vsel %vm57, %v2357, 0.0
    %v2403 = vsel %vm58, %v2362, 0.0
    %v2404 = vsel %vm59, %v2367, 0.0
    %v2405 = vsel %vm60, %v2372, 0.0
    %v2406 = vsel %vm61, %v2377, 0.0
    %v2407 = vsel %vm62, %v2382, 0.0
    %v2408 = vsel %vm63, %v2387, 0.0
    %v2409 = vsel %vm64, %v2392, 0.0
    %v2410 = vadd.f32 %v2394, %v2395
    %v2411 = vadd.f32 %v2410, %v2396
    %v2412 = vadd.f32 %v2411, %v2397
    %v2413 = vadd.f32 %v2412, %v2398
    %v2414 = vadd.f32 %v2413, %v2399
    %v2415 = vadd.f32 %v2414, %v2400
    %v2416 = vadd.f32 %v2415, %v2401
    %v2417 = vadd.f32 %v2416, %v2402
    %v2418 = vadd.f32 %v2417, %v2403
    %v2419 = vadd.f32 %v2418, %v2404
    %v2420 = vadd.f32 %v2419, %v2405
    %v2421 = vadd.f32 %v2420, %v2406
    %v2422 = vadd.f32 %v2421, %v2407
    %v2423 = vadd.f32 %v2422, %v2408
    %v2424 = vadd.f32 %v2423, %v2409
    %v2425 = vrot.slane %v2424, 4
    %v2426 = vadd.f32 %v2424, %v2425
    %v2427 = vrot.slane %v2426, 2
    %v2428 = vadd.f32 %v2426, %v2427
    %v2429 = vrot.slane %v2428, 1
    %v2430 = vadd.f32 %v2428, %v2429
    %v2431 = vadd.f32 %v2430, %v1400
    %v2432 = vld [vmem:[%s3 + $0x7] sm:$0x1]
    %v2433 = vld [vmem:[%s4 + $0x7] sm:$0x1]
    %v2434 = vmax.f32 %v2431, -6.0
    %v2435 = vmin.f32 %v2434, 6.0
    %vm2436 = vcmp.gt.f32.partialorder %v2432, 0.0
    %v2437 = vsel %vm2436, %v2435, -6.0
    %v2438 = vmax.f32 %v2431, 0.0
    %v2439 = vmul.f32 %v2431, %v2433
    %v2440 = vsub.f32 %v2438, %v2439
    %v2441 = vand.u32 2147483647, %v2431
    %v2442 = vsub.f32 0.0, %v2441
    %v2443 = vmul.f32 %v2442, 1.442695
    %v2444 = vpow.pop %v2443
    %v2445 = vadd.f32 %v2444, 1.0
    %v2446 = vlog2.pop %v2445
    %v2447 = vmul.f32 %v2446, 0.6931472
    %v2448 = vmul.f32 -0.5, %v2444
    %v2449 = vadd.f32 %v2448, 1.0
    %v2450 = vmul.f32 %v2449, %v2444
    %v2451 = vand.u32 2147483647, %v2444
    %vm2452 = vcmp.lt.f32.partialorder %v2451, 0.0004427343
    %v2453 = vsel %vm2452, %v2450, %v2447
    %v2454 = vadd.f32 %v2440, %v2453
    %v2455 = vsel %vm2436, %v2454, 0.0
    %2456 = vst [vmem:[#allocation3 + $0x7] sm:$0x1] %v2437
    %v2457 = vsel %vm1427, %v2455, 0.0
    %2458 = vadd.xlane.f32.xlu0 %v2457
    %v2459 = vpop.xlane.xlu0 %2458
    %v2460 = vadd.f32 %v2313, %v2459
    %vm2461 = vcmask 0
    %2462 = vst.msk [vmem:[#allocation5] sm:$0x1] %vm2461, %v2460
    // Predicated region
    $region22: #{tpu_custom_call.1} parent=1 // pred_check
      _
    $region23: #{tpu_custom_call.1} parent=1 // pred_check_branch
      %2464 = sbr.rel (0) target = $region25
    $region24: #{tpu_custom_call.1} parent=1 // pred_region
      %s2466 = ssub.s32 128, 128
      %2467 = vsyncadd [#allocation4], %s2466
      %s2469 = sshll.u32 [#allocation3], 4
      %s2470 = int_to_ptr.vmem [resolvable:$true] %s2469
      %2472 = dma.vmem_to_hbm [thread:$0]  %s2470, 128, %s5, [#allocation4]
    $region25: #{tpu_custom_call.1} parent=1 // pred_fallthru
      _
    // Predicated region
    $region26: #{tpu_custom_call.1} parent=1 // pred_check
      _
    $region27: #{tpu_custom_call.1} parent=1 // pred_check_branch
      %2474 = sbr.rel (0) target = $region29
    $region28: #{tpu_custom_call.1} parent=1 // pred_region
      %s2476 = ssub.s32 16, 16
      %2477 = vsyncadd [#allocation6], %s2476
      %s2479 = sshll.u32 [#allocation5], 4
      %s2480 = int_to_ptr.vmem [resolvable:$true] %s2479
      %2482 = dma.vmem_to_hbm [thread:$0]  %s2480, 16, %s6, [#allocation6]
    $region29: #{tpu_custom_call.1} parent=1 // pred_fallthru
      _
    // Predicated region
    $region30: #{tpu_custom_call.1} parent=1 // pred_check
      _
    $region31: #{tpu_custom_call.1} parent=1 // pred_check_branch
      %2484 = sbr.rel (0) target = $region33
    $region32: #{tpu_custom_call.1} parent=1 // pred_region
      %2485 = dma.done [#allocation4], 128
    $region33: #{tpu_custom_call.1} parent=1 // pred_fallthru
      _
    // Predicated region
    $region34: #{tpu_custom_call.1} parent=1 // pred_check
      _
    $region35: #{tpu_custom_call.1} parent=1 // pred_check_branch
      %2487 = sbr.rel (0) target = $region37
    $region36: #{tpu_custom_call.1} parent=1 // pred_region
      %2488 = dma.done [#allocation6], 16
    $region37: #{tpu_custom_call.1} parent=1 // pred_fallthru
      _
    %2489 = vsyncpa [#allocation4], 1
    %2490 = vsyncpa [#allocation6], 1

</llo_original>
